<compile_context>
chip_gen: v7x
topology: tpu7x:2x2x1
jax: 0.10.0
libtpu: 0.0.40
codegen_flags: <defaults>
</compile_context>

<pallas_src>
import jax
import jax.numpy as jnp
from jax.experimental import pallas as pl
from jax.experimental.pallas import tpu as pltpu

# ---------------- small synthetic Qwen2.5-style config ----------------
SEQ_LENGTH = 8
HIDDEN_SIZE = 32
NUM_ATTENTION_HEADS = 4
HEAD_DIM = HIDDEN_SIZE // NUM_ATTENTION_HEADS            # 8
NUM_KEY_VALUE_HEADS = 2
KV_GROUPS = NUM_ATTENTION_HEADS // NUM_KEY_VALUE_HEADS   # 2
INTERMEDIATE_SIZE = 64
NUM_LAYERS = 2
ROPE_THETA = 1_000_000.0
RMS_EPS = 1e-6
MASK_MIN = -1e9

Q_COLS = NUM_ATTENTION_HEADS * HEAD_DIM                  # 32
KV_COLS = NUM_KEY_VALUE_HEADS * HEAD_DIM                 # 16
QKV_COLS = Q_COLS + 2 * KV_COLS                          # 64

# Flip to jnp.bfloat16 on v6e/v7x to halve weight bytes and use the native bf16 MXU
# (kept f32 here for parity with the f32 reference; on v5e only MXU operands should
# ever be downcast since its VPU/EUP have no bf16).
MXU_DTYPE = jnp.float32


# ---------------- in-kernel helpers (traced inside the Pallas body) ----------------
def _mm(a, b):
    """2-D MXU matmul with f32 accumulation."""
    return jnp.dot(a.astype(MXU_DTYPE), b.astype(MXU_DTYPE),
                   preferred_element_type=jnp.float32)


def _rms_norm(x, g):
    # x: (S, H), g: (1, H); elementwise math stays in f32 (safe on all chips).
    var = jnp.mean(x * x, axis=-1, keepdims=True)
    return x * jax.lax.rsqrt(var + RMS_EPS) * g


def _rot_half(x):
    # Unsigned half-roll along the head dim; the rotate_half sign is folded into the
    # precomputed signed sin table passed from the wrapper.
    # TODO(synk): switch to pltpu.roll(axis=-1) once sub-128-lane rolls are guaranteed to lower.
    d = HEAD_DIM // 2
    return jnp.concatenate([x[..., d:], x[..., :d]], axis=-1)


def _head(x, h):
    # Static lane slice of head h out of a (S, n_heads*D) projection output.
    return x[:, h * HEAD_DIM:(h + 1) * HEAD_DIM]


# ---------------- the fused Block kernel (all layers in one invocation) ----------------
def qwen2_block_kernel(
    x_ref, cos_ref, sin_ref, mask_ref,
    g1_ref, wqkv_ref, bqkv_ref, wo_ref,
    g2_ref, wgu_ref, wd_ref,
    hid_ref, kv_ref,
):
    S, D, I = SEQ_LENGTH, HEAD_DIM, INTERMEDIATE_SIZE
    nH, nKV, G = NUM_ATTENTION_HEADS, NUM_KEY_VALUE_HEADS, KV_GROUPS

    x = x_ref[...]                       # (S, H) hidden state carried as a traced value

    # Broadcasts hoisted out of the (statically unrolled) layer loop.
    cos_q = cos_ref[...][None]           # (1, G*S, D) tiled over the query-head groups
    sin_q = sin_ref[...][None]           # (1, G*S, D) rotate-half sign pre-folded
    cos_k = cos_q[:, :S]                 # (1, S, D)
    sin_k = sin_q[:, :S]                 # (1, S, D)
    mask_g = mask_ref[...][None]         # (1, G*S, S) additive, tiled over head groups
    scale = 1.0 / (D ** 0.5)

    for l in range(NUM_LAYERS):          # static unroll; weights stay VMEM-resident
        # ---------------- self attention ----------------
        h1 = _rms_norm(x, g1_ref[l])
        qkv = _mm(h1, wqkv_ref[l]) + bqkv_ref[l]             # (S, 64): ONE fused MXU op
        q = qkv[:, :Q_COLS]                                   # (S, nH*D)
        k = qkv[:, Q_COLS:Q_COLS + KV_COLS]                   # (S, nKV*D)
        v = qkv[:, Q_COLS + KV_COLS:]                         # (S, nKV*D)

        # Group query heads by their KV head -> (nKV, G*S, D).  No jnp.repeat of K/V.
        q4 = jnp.stack(
            [jnp.concatenate([_head(q, kv * G + g) for g in range(G)], axis=0)
             for kv in range(nKV)], axis=0)
        k3 = jnp.stack([_head(k, j) for j in range(nKV)], axis=0)    # (nKV, S, D)
        v3 = jnp.stack([_head(v, j) for j in range(nKV)], axis=0)    # (nKV, S, D)

        # RoPE (sign folded into sin): one unsigned half-roll + two FMAs per tensor.
        q4 = q4 * cos_q + _rot_half(q4) * sin_q
        k3 = k3 * cos_k + _rot_half(k3) * sin_k

        # KV-cache writeback: a single combined (S, 2*nKV*D)-wide store per layer
        # (K post-RoPE | V raw); the wrapper un-interleaves it to (1, nKV, S, D).
        kv_ref[l] = jnp.concatenate([k3[j] for j in range(nKV)] + [v], axis=-1)

        # Attention batched over KV heads with M = G*S (GQA without replication).
        s = jnp.einsum('gqd,gkd->gqk', q4, k3,
                       preferred_element_type=jnp.float32) * scale + mask_g
        s = s - jnp.max(s, axis=-1, keepdims=True)
        p = jnp.exp(s)
        # approx=True uses the EUP reciprocal (~1e-3 rel err); set False for bit parity.
        p = p * pl.reciprocal(jnp.sum(p, axis=-1, keepdims=True), approx=True)
        ctx = jnp.einsum('gqk,gkd->gqd', p, v3,
                         preferred_element_type=jnp.float32)         # (nKV, G*S, D)

        # Merge heads back to (S, nH*D) and fold the head-sum into ONE MXU matmul.
        ctx2 = jnp.concatenate(
            [ctx[h // G, (h % G) * S:(h % G + 1) * S, :] for h in range(nH)], axis=-1)
        x = x + _mm(ctx2, wo_ref[l])                                  # (S, H)

        # ---------------- SwiGLU MLP ----------------
        h2 = _rms_norm(x, g2_ref[l])
        gu = _mm(h2, wgu_ref[l])                                      # (S, 2I) = (8,128)
        gate, up = gu[:, :I], gu[:, I:]
        act = gate * jax.nn.sigmoid(gate) * up
        x = x + _mm(act, wd_ref[l])

    hid_ref[...] = x                     # hidden state written back exactly once


# ---------------- cost estimate (advisory) ----------------
def _cost_estimate():
    S, H, I, D = SEQ_LENGTH, HIDDEN_SIZE, INTERMEDIATE_SIZE, HEAD_DIM
    nH, nKV, G, L = NUM_ATTENTION_HEADS, NUM_KEY_VALUE_HEADS, KV_GROUPS, NUM_LAYERS
    flops_layer = (
        2 * S * H * QKV_COLS                 # fused q/k/v projection
        + 2 * 2 * nKV * (G * S) * S * D      # scores + p@v (batched over KV heads)
        + 2 * S * (nH * D) * H               # output projection (head-sum in the MXU)
        + 2 * S * H * (2 * I)                # fused gate/up
        + 2 * S * I * H                      # down projection
    )
    trans_layer = nKV * G * S * S + S * I + nKV * G * S + 2 * S  # exp, sigmoid, recip, rsqrt
    weight_bytes = 4 * L * (H * QKV_COLS + QKV_COLS + nH * D * H
                            + 2 * H + H * 2 * I + I * H)
    io_bytes = 4 * (2 * S * H + 2 * G * S * D + G * S * S + L * S * 2 * nKV * D)
    return pl.CostEstimate(flops=L * flops_layer,
                           transcendentals=L * trans_layer,
                           bytes_accessed=weight_bytes + io_bytes)


# ---------------- wrapper: Block.forward equivalent ----------------
@jax.jit
def block_forward(hidden_states, position_ids, attention_mask, params, cos, sin_signed):
    """Mirror of Block.forward: returns (hidden_states, past_ks, past_vs)."""
    del position_ids  # Block uses cos/sin precomputed from range(SEQ_LENGTH) in __init__.
    S, H, D = SEQ_LENGTH, HIDDEN_SIZE, HEAD_DIM
    nKV, G, L = NUM_KEY_VALUE_HEADS, KV_GROUPS, NUM_LAYERS

    x2d = hidden_states[0]                                   # (S, H); module assumes B == 1
    mask2d = attention_mask.reshape(S, S)
    mask_g = jnp.tile(mask2d, (G, 1))                        # (G*S, S) for grouped queries
    cos_q = jnp.tile(cos, (G, 1))                            # (G*S, D)
    sin_q = jnp.tile(sin_signed, (G, 1))                     # (G*S, D)

    vmem = pl.BlockSpec(memory_space=pltpu.MemorySpace.VMEM)  # whole array, VMEM-resident
    hid, kv = pl.pallas_call(
        qwen2_block_kernel,
        out_shape=(jax.ShapeDtypeStruct((S, H), jnp.float32),
                   jax.ShapeDtypeStruct((L, S, 2 * nKV * D), jnp.float32)),
        in_specs=[vmem] * 11,
        out_specs=(vmem, vmem),
        cost_estimate=_cost_estimate(),
    )(x2d, cos_q, sin_q, mask_g,
      params["g1"], params["wqkv"], params["bqkv"], params["wo"],
      params["g2"], params["wgu"], params["wd"])

    # Un-interleave the combined KV slab into the module's (1, nKV, S, D) past_kv layout
    # (pure wrapper-side layout plumbing, outside the kernel).
    k_all = kv[:, :, :nKV * D].reshape(L, S, nKV, D).transpose(0, 2, 1, 3)
    v_all = kv[:, :, nKV * D:].reshape(L, S, nKV, D).transpose(0, 2, 1, 3)
    past_ks = [k_all[l][None] for l in range(L)]             # (1, nKV, S, D) each
    past_vs = [v_all[l][None] for l in range(L)]
    return hid[None], past_ks, past_vs


# ---------------- glue: rope tables, params ----------------
def _rope_cos_sin(seq_len, head_dim, theta):
    inv_freq = 1.0 / (theta ** (jnp.arange(0, head_dim, 2, dtype=jnp.float32) / head_dim))
    pos = jnp.arange(seq_len, dtype=jnp.float32)
    freqs = jnp.outer(pos, inv_freq)                         # (S, D/2)
    emb = jnp.concatenate([freqs, freqs], axis=-1)           # (S, D)
    cos, sin = jnp.cos(emb), jnp.sin(emb)
    # Fold the rotate_half sign (-1 on the first half, +1 on the second half) into sin,
    # so the kernel only needs an unsigned half-roll plus two fused multiply-adds.
    sign = jnp.concatenate([-jnp.ones((1, head_dim // 2), jnp.float32),
                            jnp.ones((1, head_dim // 2), jnp.float32)], axis=-1)
    return cos, sin * sign


def init_params(key):
    """Per-layer weights stacked along a leading NUM_LAYERS axis; Q/K/V and gate/up fused."""
    ks = jax.random.split(key, 5)
    L, H, D, I = NUM_LAYERS, HIDDEN_SIZE, HEAD_DIM, INTERMEDIATE_SIZE
    nH = NUM_ATTENTION_HEADS

    def w(k, shape):
        return jax.random.normal(k, shape, jnp.float32) * 0.02

    return dict(
        g1=jnp.ones((L, 1, H), jnp.float32),
        g2=jnp.ones((L, 1, H), jnp.float32),
        wqkv=w(ks[0], (L, H, QKV_COLS)),      # [Wq | Wk | Wv] fused along output columns
        bqkv=w(ks[1], (L, 1, QKV_COLS)),      # [bq | bk | bv]
        wo=w(ks[2], (L, nH * D, H)),          # o_proj, rows head-major (= o_proj.weight.T)
        wgu=w(ks[3], (L, H, 2 * I)),          # [W_gate | W_up] fused -> 128-lane matmul
        wd=w(ks[4], (L, I, H)),               # down_proj
    )


if __name__ == "__main__":
    key = jax.random.PRNGKey(0)
    k_h, k_p = jax.random.split(key)

    hidden_states = jax.random.normal(k_h, (1, SEQ_LENGTH, HIDDEN_SIZE), jnp.float32)
    position_ids = jnp.arange(SEQ_LENGTH, dtype=jnp.int32)[None, :]           # (1, S)
    # causal additive mask, shape (1, 1, S, S) like HF eager attention
    causal = jnp.tril(jnp.ones((SEQ_LENGTH, SEQ_LENGTH), jnp.float32))
    attention_mask = jnp.where(causal == 1.0, 0.0, MASK_MIN)[None, None]

    cos, sin_signed = _rope_cos_sin(SEQ_LENGTH, HEAD_DIM, ROPE_THETA)
    params = init_params(k_p)

    out_hidden, past_ks, past_vs = block_forward(
        hidden_states, position_ids, attention_mask, params, cos, sin_signed)

    jax.block_until_ready(out_hidden)
    jax.block_until_ready(past_ks)
    jax.block_until_ready(past_vs)

    assert out_hidden.shape == (1, SEQ_LENGTH, HIDDEN_SIZE)
    assert len(past_ks) == NUM_LAYERS and len(past_vs) == NUM_LAYERS
    assert past_ks[0].shape == (1, NUM_KEY_VALUE_HEADS, SEQ_LENGTH, HEAD_DIM)
    assert past_vs[0].shape == (1, NUM_KEY_VALUE_HEADS, SEQ_LENGTH, HEAD_DIM)
    assert bool(jnp.all(jnp.isfinite(out_hidden)))
    print("KERNEL_OK")
</pallas_src>

<mosaic_0001>
module attributes {stable_mosaic.version = 11 : i64} {
  func.func @qwen2_block_kernel(%arg0: memref<8x32xf32, #tpu.memory_space<vmem>>, %arg1: memref<16x8xf32, #tpu.memory_space<vmem>>, %arg2: memref<16x8xf32, #tpu.memory_space<vmem>>, %arg3: memref<16x8xf32, #tpu.memory_space<vmem>>, %arg4: memref<2x1x32xf32, #tpu.memory_space<vmem>>, %arg5: memref<2x32x64xf32, #tpu.memory_space<vmem>>, %arg6: memref<2x1x64xf32, #tpu.memory_space<vmem>>, %arg7: memref<2x32x32xf32, #tpu.memory_space<vmem>>, %arg8: memref<2x1x32xf32, #tpu.memory_space<vmem>>, %arg9: memref<2x32x128xf32, #tpu.memory_space<vmem>>, %arg10: memref<2x64x32xf32, #tpu.memory_space<vmem>>, %arg11: memref<8x32xf32, #tpu.memory_space<vmem>>, %arg12: memref<2x8x32xf32, #tpu.memory_space<vmem>>) attributes {dimension_semantics = [], scalar_prefetch = 0 : i64, scratch_operands = 0 : i64, tpu.core_type = #tpu.core_type<tc>} {
    %c0 = arith.constant 0 : index
    %c0_0 = arith.constant 0 : index
    %0 = vector.load %arg0[%c0, %c0_0] : memref<8x32xf32, #tpu.memory_space<vmem>>, vector<8x32xf32>
    %c0_1 = arith.constant 0 : index
    %c0_2 = arith.constant 0 : index
    %1 = vector.load %arg1[%c0_1, %c0_2] : memref<16x8xf32, #tpu.memory_space<vmem>>, vector<16x8xf32>
    %2 = vector.shape_cast %1 : vector<16x8xf32> to vector<1x16x8xf32>
    %c0_3 = arith.constant 0 : index
    %c0_4 = arith.constant 0 : index
    %3 = vector.load %arg2[%c0_3, %c0_4] : memref<16x8xf32, #tpu.memory_space<vmem>>, vector<16x8xf32>
    %4 = vector.shape_cast %3 : vector<16x8xf32> to vector<1x16x8xf32>
    %5 = vector.extract_strided_slice %2 {offsets = [0, 0, 0], sizes = [1, 8, 8], strides = [1, 1, 1]} : vector<1x16x8xf32> to vector<1x8x8xf32>
    %6 = vector.extract_strided_slice %4 {offsets = [0, 0, 0], sizes = [1, 8, 8], strides = [1, 1, 1]} : vector<1x16x8xf32> to vector<1x8x8xf32>
    %c0_5 = arith.constant 0 : index
    %c0_6 = arith.constant 0 : index
    %7 = vector.load %arg3[%c0_5, %c0_6] : memref<16x8xf32, #tpu.memory_space<vmem>>, vector<16x8xf32>
    %8 = vector.shape_cast %7 : vector<16x8xf32> to vector<1x16x8xf32>
    %c0_7 = arith.constant 0 : index
    %c0_8 = arith.constant 0 : index
    %c0_9 = arith.constant 0 : index
    %9 = vector.load %arg4[%c0_7, %c0_8, %c0_9] : memref<2x1x32xf32, #tpu.memory_space<vmem>>, vector<1x1x32xf32>
    %10 = vector.shape_cast %9 : vector<1x1x32xf32> to vector<1x32xf32>
    %11 = arith.mulf %0, %0 : vector<8x32xf32>
    %cst = arith.constant dense<0.000000e+00> : vector<8xf32>
    %12 = vector.multi_reduction <add>, %11, %cst [1] : vector<8x32xf32> to vector<8xf32>
    %13 = vector.shape_cast %12 : vector<8xf32> to vector<8x1xf32>
    %cst_10 = arith.constant 3.200000e+01 : f32
    %14 = vector.broadcast %cst_10 : f32 to vector<8x1xf32>
    %15 = arith.divf %13, %14 : vector<8x1xf32>
    %cst_11 = arith.constant 9.99999997E-7 : f32
    %16 = vector.broadcast %cst_11 : f32 to vector<8x1xf32>
    %17 = arith.addf %15, %16 : vector<8x1xf32>
    %18 = math.rsqrt %17 : vector<8x1xf32>
    %19 = vector.broadcast %18 : vector<8x1xf32> to vector<8x32xf32>
    %20 = arith.mulf %0, %19 : vector<8x32xf32>
    %21 = vector.broadcast %10 : vector<1x32xf32> to vector<8x32xf32>
    %22 = arith.mulf %20, %21 : vector<8x32xf32>
    %c0_12 = arith.constant 0 : index
    %c0_13 = arith.constant 0 : index
    %c0_14 = arith.constant 0 : index
    %23 = vector.load %arg5[%c0_12, %c0_13, %c0_14] : memref<2x32x64xf32, #tpu.memory_space<vmem>>, vector<1x32x64xf32>
    %24 = vector.shape_cast %23 : vector<1x32x64xf32> to vector<32x64xf32>
    %cst_15 = arith.constant dense<0.000000e+00> : vector<8x64xf32>
    %25 = tpu.matmul %22, %24, %cst_15 {dimension_numbers = #tpu.dot_dimension_numbers<[1], [0], [0], [1], [0, 0, 1, 1], [], []>} : vector<8x32xf32>, vector<32x64xf32>, vector<8x64xf32> -> vector<8x64xf32>
    %c0_16 = arith.constant 0 : index
    %c0_17 = arith.constant 0 : index
    %c0_18 = arith.constant 0 : index
    %26 = vector.load %arg6[%c0_16, %c0_17, %c0_18] : memref<2x1x64xf32, #tpu.memory_space<vmem>>, vector<1x1x64xf32>
    %27 = vector.shape_cast %26 : vector<1x1x64xf32> to vector<1x64xf32>
    %28 = vector.broadcast %27 : vector<1x64xf32> to vector<8x64xf32>
    %29 = arith.addf %25, %28 : vector<8x64xf32>
    %30 = vector.extract_strided_slice %29 {offsets = [0, 0], sizes = [8, 32], strides = [1, 1]} : vector<8x64xf32> to vector<8x32xf32>
    %31 = vector.extract_strided_slice %29 {offsets = [0, 32], sizes = [8, 16], strides = [1, 1]} : vector<8x64xf32> to vector<8x16xf32>
    %32 = vector.extract_strided_slice %29 {offsets = [0, 48], sizes = [8, 16], strides = [1, 1]} : vector<8x64xf32> to vector<8x16xf32>
    %33 = vector.extract_strided_slice %30 {offsets = [0, 0], sizes = [8, 8], strides = [1, 1]} : vector<8x32xf32> to vector<8x8xf32>
    %34 = vector.extract_strided_slice %30 {offsets = [0, 8], sizes = [8, 8], strides = [1, 1]} : vector<8x32xf32> to vector<8x8xf32>
    %35 = tpu.concatenate %33, %34 in 0 : vector<8x8xf32>, vector<8x8xf32> -> vector<16x8xf32>
    %36 = vector.extract_strided_slice %30 {offsets = [0, 16], sizes = [8, 8], strides = [1, 1]} : vector<8x32xf32> to vector<8x8xf32>
    %37 = vector.extract_strided_slice %30 {offsets = [0, 24], sizes = [8, 8], strides = [1, 1]} : vector<8x32xf32> to vector<8x8xf32>
    %38 = tpu.concatenate %36, %37 in 0 : vector<8x8xf32>, vector<8x8xf32> -> vector<16x8xf32>
    %39 = vector.shape_cast %35 : vector<16x8xf32> to vector<1x16x8xf32>
    %40 = vector.shape_cast %38 : vector<16x8xf32> to vector<1x16x8xf32>
    %41 = tpu.concatenate %39, %40 in 0 : vector<1x16x8xf32>, vector<1x16x8xf32> -> vector<2x16x8xf32>
    %42 = vector.extract_strided_slice %31 {offsets = [0, 0], sizes = [8, 8], strides = [1, 1]} : vector<8x16xf32> to vector<8x8xf32>
    %43 = vector.extract_strided_slice %31 {offsets = [0, 8], sizes = [8, 8], strides = [1, 1]} : vector<8x16xf32> to vector<8x8xf32>
    %44 = vector.shape_cast %42 : vector<8x8xf32> to vector<1x8x8xf32>
    %45 = vector.shape_cast %43 : vector<8x8xf32> to vector<1x8x8xf32>
    %46 = tpu.concatenate %44, %45 in 0 : vector<1x8x8xf32>, vector<1x8x8xf32> -> vector<2x8x8xf32>
    %47 = vector.extract_strided_slice %32 {offsets = [0, 0], sizes = [8, 8], strides = [1, 1]} : vector<8x16xf32> to vector<8x8xf32>
    %48 = vector.extract_strided_slice %32 {offsets = [0, 8], sizes = [8, 8], strides = [1, 1]} : vector<8x16xf32> to vector<8x8xf32>
    %49 = vector.shape_cast %47 : vector<8x8xf32> to vector<1x8x8xf32>
    %50 = vector.shape_cast %48 : vector<8x8xf32> to vector<1x8x8xf32>
    %51 = tpu.concatenate %49, %50 in 0 : vector<1x8x8xf32>, vector<1x8x8xf32> -> vector<2x8x8xf32>
    %52 = vector.broadcast %2 : vector<1x16x8xf32> to vector<2x16x8xf32>
    %53 = arith.mulf %41, %52 : vector<2x16x8xf32>
    %54 = vector.extract_strided_slice %41 {offsets = [0, 0, 4], sizes = [2, 16, 4], strides = [1, 1, 1]} : vector<2x16x8xf32> to vector<2x16x4xf32>
    %55 = vector.extract_strided_slice %41 {offsets = [0, 0, 0], sizes = [2, 16, 4], strides = [1, 1, 1]} : vector<2x16x8xf32> to vector<2x16x4xf32>
    %56 = tpu.concatenate %54, %55 in 2 : vector<2x16x4xf32>, vector<2x16x4xf32> -> vector<2x16x8xf32>
    %57 = vector.broadcast %4 : vector<1x16x8xf32> to vector<2x16x8xf32>
    %58 = arith.mulf %56, %57 : vector<2x16x8xf32>
    %59 = arith.addf %53, %58 : vector<2x16x8xf32>
    %60 = vector.broadcast %5 : vector<1x8x8xf32> to vector<2x8x8xf32>
    %61 = arith.mulf %46, %60 : vector<2x8x8xf32>
    %62 = vector.extract_strided_slice %46 {offsets = [0, 0, 4], sizes = [2, 8, 4], strides = [1, 1, 1]} : vector<2x8x8xf32> to vector<2x8x4xf32>
    %63 = vector.extract_strided_slice %46 {offsets = [0, 0, 0], sizes = [2, 8, 4], strides = [1, 1, 1]} : vector<2x8x8xf32> to vector<2x8x4xf32>
    %64 = tpu.concatenate %62, %63 in 2 : vector<2x8x4xf32>, vector<2x8x4xf32> -> vector<2x8x8xf32>
    %65 = vector.broadcast %6 : vector<1x8x8xf32> to vector<2x8x8xf32>
    %66 = arith.mulf %64, %65 : vector<2x8x8xf32>
    %67 = arith.addf %61, %66 : vector<2x8x8xf32>
    %68 = vector.extract_strided_slice %67 {offsets = [0, 0, 0], sizes = [1, 8, 8], strides = [1, 1, 1]} : vector<2x8x8xf32> to vector<1x8x8xf32>
    %69 = vector.shape_cast %68 : vector<1x8x8xf32> to vector<8x8xf32>
    %70 = vector.extract_strided_slice %67 {offsets = [1, 0, 0], sizes = [1, 8, 8], strides = [1, 1, 1]} : vector<2x8x8xf32> to vector<1x8x8xf32>
    %71 = vector.shape_cast %70 : vector<1x8x8xf32> to vector<8x8xf32>
    %72 = tpu.concatenate %69, %71, %32 in 1 : vector<8x8xf32>, vector<8x8xf32>, vector<8x16xf32> -> vector<8x32xf32>
    %c0_19 = arith.constant 0 : index
    %c0_20 = arith.constant 0 : index
    %c0_21 = arith.constant 0 : index
    %73 = vector.load %arg12[%c0_19, %c0_20, %c0_21] : memref<2x8x32xf32, #tpu.memory_space<vmem>>, vector<1x8x32xf32>
    %74 = vector.shape_cast %73 : vector<1x8x32xf32> to vector<8x32xf32>
    %75 = vector.shape_cast %72 : vector<8x32xf32> to vector<1x8x32xf32>
    tpu.vector_store %arg12[%c0_19, %c0_20, %c0_21], %75 {strides = array<i32>} : memref<2x8x32xf32, #tpu.memory_space<vmem>>, vector<1x8x32xf32>,
    "tpu.trace_start"() <{level = 10 : i32, message = "gqd,gkd->gqk"}> : () -> ()
    %cst_22 = arith.constant dense<0.000000e+00> : vector<2x16x8xf32>
    %76 = tpu.matmul %59, %67, %cst_22 {dimension_numbers = #tpu.dot_dimension_numbers<[2], [2], [1], [1], [0, 0, 0, 1, 1, 1], [0], [0]>} : vector<2x16x8xf32>, vector<2x8x8xf32>, vector<2x16x8xf32> -> vector<2x16x8xf32>
    "tpu.trace_stop"() : () -> ()
    %cst_23 = arith.constant 0.353553385 : f32
    %77 = vector.broadcast %cst_23 : f32 to vector<2x16x8xf32>
    %78 = arith.mulf %76, %77 : vector<2x16x8xf32>
    %79 = vector.broadcast %8 : vector<1x16x8xf32> to vector<2x16x8xf32>
    %80 = arith.addf %78, %79 : vector<2x16x8xf32>
    %cst_24 = arith.constant dense<0xFF800000> : vector<2x16xf32>
    %81 = vector.multi_reduction <maximumf>, %80, %cst_24 [2] : vector<2x16x8xf32> to vector<2x16xf32>
    %82 = vector.shape_cast %81 : vector<2x16xf32> to vector<2x16x1xf32>
    %83 = vector.broadcast %82 : vector<2x16x1xf32> to vector<2x16x8xf32>
    %84 = arith.subf %80, %83 : vector<2x16x8xf32>
    %85 = math.exp %84 : vector<2x16x8xf32>
    %cst_25 = arith.constant dense<0.000000e+00> : vector<2x16xf32>
    %86 = vector.multi_reduction <add>, %85, %cst_25 [2] : vector<2x16x8xf32> to vector<2x16xf32>
    %87 = vector.shape_cast %86 : vector<2x16xf32> to vector<2x16x1xf32>
    %88 = tpu.reciprocal %87 {approx = true} : vector<2x16x1xf32> -> vector<2x16x1xf32>
    %89 = vector.broadcast %88 : vector<2x16x1xf32> to vector<2x16x8xf32>
    %90 = arith.mulf %85, %89 : vector<2x16x8xf32>
    "tpu.trace_start"() <{level = 10 : i32, message = "gqk,gkd->gqd"}> : () -> ()
    %cst_26 = arith.constant dense<0.000000e+00> : vector<2x16x8xf32>
    %91 = tpu.matmul %90, %51, %cst_26 {dimension_numbers = #tpu.dot_dimension_numbers<[2], [1], [1], [2], [0, 0, 0, 1, 1, 2], [0], [0]>} : vector<2x16x8xf32>, vector<2x8x8xf32>, vector<2x16x8xf32> -> vector<2x16x8xf32>
    "tpu.trace_stop"() : () -> ()
    %92 = vector.extract_strided_slice %91 {offsets = [0, 0, 0], sizes = [1, 8, 8], strides = [1, 1, 1]} : vector<2x16x8xf32> to vector<1x8x8xf32>
    %93 = vector.shape_cast %92 : vector<1x8x8xf32> to vector<8x8xf32>
    %94 = vector.extract_strided_slice %91 {offsets = [0, 8, 0], sizes = [1, 8, 8], strides = [1, 1, 1]} : vector<2x16x8xf32> to vector<1x8x8xf32>
    %95 = vector.shape_cast %94 : vector<1x8x8xf32> to vector<8x8xf32>
    %96 = vector.extract_strided_slice %91 {offsets = [1, 0, 0], sizes = [1, 8, 8], strides = [1, 1, 1]} : vector<2x16x8xf32> to vector<1x8x8xf32>
    %97 = vector.shape_cast %96 : vector<1x8x8xf32> to vector<8x8xf32>
    %98 = vector.extract_strided_slice %91 {offsets = [1, 8, 0], sizes = [1, 8, 8], strides = [1, 1, 1]} : vector<2x16x8xf32> to vector<1x8x8xf32>
    %99 = vector.shape_cast %98 : vector<1x8x8xf32> to vector<8x8xf32>
    %100 = tpu.concatenate %93, %95, %97, %99 in 1 : vector<8x8xf32>, vector<8x8xf32>, vector<8x8xf32>, vector<8x8xf32> -> vector<8x32xf32>
    %c0_27 = arith.constant 0 : index
    %c0_28 = arith.constant 0 : index
    %c0_29 = arith.constant 0 : index
    %101 = vector.load %arg7[%c0_27, %c0_28, %c0_29] : memref<2x32x32xf32, #tpu.memory_space<vmem>>, vector<1x32x32xf32>
    %102 = vector.shape_cast %101 : vector<1x32x32xf32> to vector<32x32xf32>
    %cst_30 = arith.constant dense<0.000000e+00> : vector<8x32xf32>
    %103 = tpu.matmul %100, %102, %cst_30 {dimension_numbers = #tpu.dot_dimension_numbers<[1], [0], [0], [1], [0, 0, 1, 1], [], []>} : vector<8x32xf32>, vector<32x32xf32>, vector<8x32xf32> -> vector<8x32xf32>
    %104 = arith.addf %0, %103 : vector<8x32xf32>
    %c0_31 = arith.constant 0 : index
    %c0_32 = arith.constant 0 : index
    %c0_33 = arith.constant 0 : index
    %105 = vector.load %arg8[%c0_31, %c0_32, %c0_33] : memref<2x1x32xf32, #tpu.memory_space<vmem>>, vector<1x1x32xf32>
    %106 = vector.shape_cast %105 : vector<1x1x32xf32> to vector<1x32xf32>
    %107 = arith.mulf %104, %104 : vector<8x32xf32>
    %cst_34 = arith.constant dense<0.000000e+00> : vector<8xf32>
    %108 = vector.multi_reduction <add>, %107, %cst_34 [1] : vector<8x32xf32> to vector<8xf32>
    %109 = vector.shape_cast %108 : vector<8xf32> to vector<8x1xf32>
    %cst_35 = arith.constant 3.200000e+01 : f32
    %110 = vector.broadcast %cst_35 : f32 to vector<8x1xf32>
    %111 = arith.divf %109, %110 : vector<8x1xf32>
    %cst_36 = arith.constant 9.99999997E-7 : f32
    %112 = vector.broadcast %cst_36 : f32 to vector<8x1xf32>
    %113 = arith.addf %111, %112 : vector<8x1xf32>
    %114 = math.rsqrt %113 : vector<8x1xf32>
    %115 = vector.broadcast %114 : vector<8x1xf32> to vector<8x32xf32>
    %116 = arith.mulf %104, %115 : vector<8x32xf32>
    %117 = vector.broadcast %106 : vector<1x32xf32> to vector<8x32xf32>
    %118 = arith.mulf %116, %117 : vector<8x32xf32>
    %c0_37 = arith.constant 0 : index
    %c0_38 = arith.constant 0 : index
    %c0_39 = arith.constant 0 : index
    %119 = vector.load %arg9[%c0_37, %c0_38, %c0_39] : memref<2x32x128xf32, #tpu.memory_space<vmem>>, vector<1x32x128xf32>
    %120 = vector.shape_cast %119 : vector<1x32x128xf32> to vector<32x128xf32>
    %cst_40 = arith.constant dense<0.000000e+00> : vector<8x128xf32>
    %121 = tpu.matmul %118, %120, %cst_40 {dimension_numbers = #tpu.dot_dimension_numbers<[1], [0], [0], [1], [0, 0, 1, 1], [], []>} : vector<8x32xf32>, vector<32x128xf32>, vector<8x128xf32> -> vector<8x128xf32>
    %122 = vector.extract_strided_slice %121 {offsets = [0, 0], sizes = [8, 64], strides = [1, 1]} : vector<8x128xf32> to vector<8x64xf32>
    %123 = vector.extract_strided_slice %121 {offsets = [0, 64], sizes = [8, 64], strides = [1, 1]} : vector<8x128xf32> to vector<8x64xf32>
    %124 = arith.negf %122 : vector<8x64xf32>
    %125 = math.exp %124 : vector<8x64xf32>
    %cst_41 = arith.constant 1.000000e+00 : f32
    %126 = vector.broadcast %cst_41 : f32 to vector<8x64xf32>
    %127 = arith.addf %126, %125 : vector<8x64xf32>
    %128 = arith.divf %126, %127 : vector<8x64xf32>
    %129 = arith.mulf %122, %128 : vector<8x64xf32>
    %130 = arith.mulf %129, %123 : vector<8x64xf32>
    %c0_42 = arith.constant 0 : index
    %c0_43 = arith.constant 0 : index
    %c0_44 = arith.constant 0 : index
    %131 = vector.load %arg10[%c0_42, %c0_43, %c0_44] : memref<2x64x32xf32, #tpu.memory_space<vmem>>, vector<1x64x32xf32>
    %132 = vector.shape_cast %131 : vector<1x64x32xf32> to vector<64x32xf32>
    %cst_45 = arith.constant dense<0.000000e+00> : vector<8x32xf32>
    %133 = tpu.matmul %130, %132, %cst_45 {dimension_numbers = #tpu.dot_dimension_numbers<[1], [0], [0], [1], [0, 0, 1, 1], [], []>} : vector<8x64xf32>, vector<64x32xf32>, vector<8x32xf32> -> vector<8x32xf32>
    %134 = arith.addf %104, %133 : vector<8x32xf32>
    %c1 = arith.constant 1 : index
    %c0_46 = arith.constant 0 : index
    %c0_47 = arith.constant 0 : index
    %135 = vector.load %arg4[%c1, %c0_46, %c0_47] : memref<2x1x32xf32, #tpu.memory_space<vmem>>, vector<1x1x32xf32>
    %136 = vector.shape_cast %135 : vector<1x1x32xf32> to vector<1x32xf32>
    %137 = arith.mulf %134, %134 : vector<8x32xf32>
    %cst_48 = arith.constant dense<0.000000e+00> : vector<8xf32>
    %138 = vector.multi_reduction <add>, %137, %cst_48 [1] : vector<8x32xf32> to vector<8xf32>
    %139 = vector.shape_cast %138 : vector<8xf32> to vector<8x1xf32>
    %cst_49 = arith.constant 3.200000e+01 : f32
    %140 = vector.broadcast %cst_49 : f32 to vector<8x1xf32>
    %141 = arith.divf %139, %140 : vector<8x1xf32>
    %cst_50 = arith.constant 9.99999997E-7 : f32
    %142 = vector.broadcast %cst_50 : f32 to vector<8x1xf32>
    %143 = arith.addf %141, %142 : vector<8x1xf32>
    %144 = math.rsqrt %143 : vector<8x1xf32>
    %145 = vector.broadcast %144 : vector<8x1xf32> to vector<8x32xf32>
    %146 = arith.mulf %134, %145 : vector<8x32xf32>
    %147 = vector.broadcast %136 : vector<1x32xf32> to vector<8x32xf32>
    %148 = arith.mulf %146, %147 : vector<8x32xf32>
    %c1_51 = arith.constant 1 : index
    %c0_52 = arith.constant 0 : index
    %c0_53 = arith.constant 0 : index
    %149 = vector.load %arg5[%c1_51, %c0_52, %c0_53] : memref<2x32x64xf32, #tpu.memory_space<vmem>>, vector<1x32x64xf32>
    %150 = vector.shape_cast %149 : vector<1x32x64xf32> to vector<32x64xf32>
    %cst_54 = arith.constant dense<0.000000e+00> : vector<8x64xf32>
    %151 = tpu.matmul %148, %150, %cst_54 {dimension_numbers = #tpu.dot_dimension_numbers<[1], [0], [0], [1], [0, 0, 1, 1], [], []>} : vector<8x32xf32>, vector<32x64xf32>, vector<8x64xf32> -> vector<8x64xf32>
    %c1_55 = arith.constant 1 : index
    %c0_56 = arith.constant 0 : index
    %c0_57 = arith.constant 0 : index
    %152 = vector.load %arg6[%c1_55, %c0_56, %c0_57] : memref<2x1x64xf32, #tpu.memory_space<vmem>>, vector<1x1x64xf32>
    %153 = vector.shape_cast %152 : vector<1x1x64xf32> to vector<1x64xf32>
    %154 = vector.broadcast %153 : vector<1x64xf32> to vector<8x64xf32>
    %155 = arith.addf %151, %154 : vector<8x64xf32>
    %156 = vector.extract_strided_slice %155 {offsets = [0, 0], sizes = [8, 32], strides = [1, 1]} : vector<8x64xf32> to vector<8x32xf32>
    %157 = vector.extract_strided_slice %155 {offsets = [0, 32], sizes = [8, 16], strides = [1, 1]} : vector<8x64xf32> to vector<8x16xf32>
    %158 = vector.extract_strided_slice %155 {offsets = [0, 48], sizes = [8, 16], strides = [1, 1]} : vector<8x64xf32> to vector<8x16xf32>
    %159 = vector.extract_strided_slice %156 {offsets = [0, 0], sizes = [8, 8], strides = [1, 1]} : vector<8x32xf32> to vector<8x8xf32>
    %160 = vector.extract_strided_slice %156 {offsets = [0, 8], sizes = [8, 8], strides = [1, 1]} : vector<8x32xf32> to vector<8x8xf32>
    %161 = tpu.concatenate %159, %160 in 0 : vector<8x8xf32>, vector<8x8xf32> -> vector<16x8xf32>
    %162 = vector.extract_strided_slice %156 {offsets = [0, 16], sizes = [8, 8], strides = [1, 1]} : vector<8x32xf32> to vector<8x8xf32>
    %163 = vector.extract_strided_slice %156 {offsets = [0, 24], sizes = [8, 8], strides = [1, 1]} : vector<8x32xf32> to vector<8x8xf32>
    %164 = tpu.concatenate %162, %163 in 0 : vector<8x8xf32>, vector<8x8xf32> -> vector<16x8xf32>
    %165 = vector.shape_cast %161 : vector<16x8xf32> to vector<1x16x8xf32>
    %166 = vector.shape_cast %164 : vector<16x8xf32> to vector<1x16x8xf32>
    %167 = tpu.concatenate %165, %166 in 0 : vector<1x16x8xf32>, vector<1x16x8xf32> -> vector<2x16x8xf32>
    %168 = vector.extract_strided_slice %157 {offsets = [0, 0], sizes = [8, 8], strides = [1, 1]} : vector<8x16xf32> to vector<8x8xf32>
    %169 = vector.extract_strided_slice %157 {offsets = [0, 8], sizes = [8, 8], strides = [1, 1]} : vector<8x16xf32> to vector<8x8xf32>
    %170 = vector.shape_cast %168 : vector<8x8xf32> to vector<1x8x8xf32>
    %171 = vector.shape_cast %169 : vector<8x8xf32> to vector<1x8x8xf32>
    %172 = tpu.concatenate %170, %171 in 0 : vector<1x8x8xf32>, vector<1x8x8xf32> -> vector<2x8x8xf32>
    %173 = vector.extract_strided_slice %158 {offsets = [0, 0], sizes = [8, 8], strides = [1, 1]} : vector<8x16xf32> to vector<8x8xf32>
    %174 = vector.extract_strided_slice %158 {offsets = [0, 8], sizes = [8, 8], strides = [1, 1]} : vector<8x16xf32> to vector<8x8xf32>
    %175 = vector.shape_cast %173 : vector<8x8xf32> to vector<1x8x8xf32>
    %176 = vector.shape_cast %174 : vector<8x8xf32> to vector<1x8x8xf32>
    %177 = tpu.concatenate %175, %176 in 0 : vector<1x8x8xf32>, vector<1x8x8xf32> -> vector<2x8x8xf32>
    %178 = vector.broadcast %2 : vector<1x16x8xf32> to vector<2x16x8xf32>
    %179 = arith.mulf %167, %178 : vector<2x16x8xf32>
    %180 = vector.extract_strided_slice %167 {offsets = [0, 0, 4], sizes = [2, 16, 4], strides = [1, 1, 1]} : vector<2x16x8xf32> to vector<2x16x4xf32>
    %181 = vector.extract_strided_slice %167 {offsets = [0, 0, 0], sizes = [2, 16, 4], strides = [1, 1, 1]} : vector<2x16x8xf32> to vector<2x16x4xf32>
    %182 = tpu.concatenate %180, %181 in 2 : vector<2x16x4xf32>, vector<2x16x4xf32> -> vector<2x16x8xf32>
    %183 = vector.broadcast %4 : vector<1x16x8xf32> to vector<2x16x8xf32>
    %184 = arith.mulf %182, %183 : vector<2x16x8xf32>
    %185 = arith.addf %179, %184 : vector<2x16x8xf32>
    %186 = vector.broadcast %5 : vector<1x8x8xf32> to vector<2x8x8xf32>
    %187 = arith.mulf %172, %186 : vector<2x8x8xf32>
    %188 = vector.extract_strided_slice %172 {offsets = [0, 0, 4], sizes = [2, 8, 4], strides = [1, 1, 1]} : vector<2x8x8xf32> to vector<2x8x4xf32>
    %189 = vector.extract_strided_slice %172 {offsets = [0, 0, 0], sizes = [2, 8, 4], strides = [1, 1, 1]} : vector<2x8x8xf32> to vector<2x8x4xf32>
    %190 = tpu.concatenate %188, %189 in 2 : vector<2x8x4xf32>, vector<2x8x4xf32> -> vector<2x8x8xf32>
    %191 = vector.broadcast %6 : vector<1x8x8xf32> to vector<2x8x8xf32>
    %192 = arith.mulf %190, %191 : vector<2x8x8xf32>
    %193 = arith.addf %187, %192 : vector<2x8x8xf32>
    %194 = vector.extract_strided_slice %193 {offsets = [0, 0, 0], sizes = [1, 8, 8], strides = [1, 1, 1]} : vector<2x8x8xf32> to vector<1x8x8xf32>
    %195 = vector.shape_cast %194 : vector<1x8x8xf32> to vector<8x8xf32>
    %196 = vector.extract_strided_slice %193 {offsets = [1, 0, 0], sizes = [1, 8, 8], strides = [1, 1, 1]} : vector<2x8x8xf32> to vector<1x8x8xf32>
    %197 = vector.shape_cast %196 : vector<1x8x8xf32> to vector<8x8xf32>
    %198 = tpu.concatenate %195, %197, %158 in 1 : vector<8x8xf32>, vector<8x8xf32>, vector<8x16xf32> -> vector<8x32xf32>
    %c1_58 = arith.constant 1 : index
    %c0_59 = arith.constant 0 : index
    %c0_60 = arith.constant 0 : index
    %199 = vector.load %arg12[%c1_58, %c0_59, %c0_60] : memref<2x8x32xf32, #tpu.memory_space<vmem>>, vector<1x8x32xf32>
    %200 = vector.shape_cast %199 : vector<1x8x32xf32> to vector<8x32xf32>
    %201 = vector.shape_cast %198 : vector<8x32xf32> to vector<1x8x32xf32>
    tpu.vector_store %arg12[%c1_58, %c0_59, %c0_60], %201 {strides = array<i32>} : memref<2x8x32xf32, #tpu.memory_space<vmem>>, vector<1x8x32xf32>,
    "tpu.trace_start"() <{level = 10 : i32, message = "gqd,gkd->gqk"}> : () -> ()
    %cst_61 = arith.constant dense<0.000000e+00> : vector<2x16x8xf32>
    %202 = tpu.matmul %185, %193, %cst_61 {dimension_numbers = #tpu.dot_dimension_numbers<[2], [2], [1], [1], [0, 0, 0, 1, 1, 1], [0], [0]>} : vector<2x16x8xf32>, vector<2x8x8xf32>, vector<2x16x8xf32> -> vector<2x16x8xf32>
    "tpu.trace_stop"() : () -> ()
    %cst_62 = arith.constant 0.353553385 : f32
    %203 = vector.broadcast %cst_62 : f32 to vector<2x16x8xf32>
    %204 = arith.mulf %202, %203 : vector<2x16x8xf32>
    %205 = vector.broadcast %8 : vector<1x16x8xf32> to vector<2x16x8xf32>
    %206 = arith.addf %204, %205 : vector<2x16x8xf32>
    %cst_63 = arith.constant dense<0xFF800000> : vector<2x16xf32>
    %207 = vector.multi_reduction <maximumf>, %206, %cst_63 [2] : vector<2x16x8xf32> to vector<2x16xf32>
    %208 = vector.shape_cast %207 : vector<2x16xf32> to vector<2x16x1xf32>
    %209 = vector.broadcast %208 : vector<2x16x1xf32> to vector<2x16x8xf32>
    %210 = arith.subf %206, %209 : vector<2x16x8xf32>
    %211 = math.exp %210 : vector<2x16x8xf32>
    %cst_64 = arith.constant dense<0.000000e+00> : vector<2x16xf32>
    %212 = vector.multi_reduction <add>, %211, %cst_64 [2] : vector<2x16x8xf32> to vector<2x16xf32>
    %213 = vector.shape_cast %212 : vector<2x16xf32> to vector<2x16x1xf32>
    %214 = tpu.reciprocal %213 {approx = true} : vector<2x16x1xf32> -> vector<2x16x1xf32>
    %215 = vector.broadcast %214 : vector<2x16x1xf32> to vector<2x16x8xf32>
    %216 = arith.mulf %211, %215 : vector<2x16x8xf32>
    "tpu.trace_start"() <{level = 10 : i32, message = "gqk,gkd->gqd"}> : () -> ()
    %cst_65 = arith.constant dense<0.000000e+00> : vector<2x16x8xf32>
    %217 = tpu.matmul %216, %177, %cst_65 {dimension_numbers = #tpu.dot_dimension_numbers<[2], [1], [1], [2], [0, 0, 0, 1, 1, 2], [0], [0]>} : vector<2x16x8xf32>, vector<2x8x8xf32>, vector<2x16x8xf32> -> vector<2x16x8xf32>
    "tpu.trace_stop"() : () -> ()
    %218 = vector.extract_strided_slice %217 {offsets = [0, 0, 0], sizes = [1, 8, 8], strides = [1, 1, 1]} : vector<2x16x8xf32> to vector<1x8x8xf32>
    %219 = vector.shape_cast %218 : vector<1x8x8xf32> to vector<8x8xf32>
    %220 = vector.extract_strided_slice %217 {offsets = [0, 8, 0], sizes = [1, 8, 8], strides = [1, 1, 1]} : vector<2x16x8xf32> to vector<1x8x8xf32>
    %221 = vector.shape_cast %220 : vector<1x8x8xf32> to vector<8x8xf32>
    %222 = vector.extract_strided_slice %217 {offsets = [1, 0, 0], sizes = [1, 8, 8], strides = [1, 1, 1]} : vector<2x16x8xf32> to vector<1x8x8xf32>
    %223 = vector.shape_cast %222 : vector<1x8x8xf32> to vector<8x8xf32>
    %224 = vector.extract_strided_slice %217 {offsets = [1, 8, 0], sizes = [1, 8, 8], strides = [1, 1, 1]} : vector<2x16x8xf32> to vector<1x8x8xf32>
    %225 = vector.shape_cast %224 : vector<1x8x8xf32> to vector<8x8xf32>
    %226 = tpu.concatenate %219, %221, %223, %225 in 1 : vector<8x8xf32>, vector<8x8xf32>, vector<8x8xf32>, vector<8x8xf32> -> vector<8x32xf32>
    %c1_66 = arith.constant 1 : index
    %c0_67 = arith.constant 0 : index
    %c0_68 = arith.constant 0 : index
    %227 = vector.load %arg7[%c1_66, %c0_67, %c0_68] : memref<2x32x32xf32, #tpu.memory_space<vmem>>, vector<1x32x32xf32>
    %228 = vector.shape_cast %227 : vector<1x32x32xf32> to vector<32x32xf32>
    %cst_69 = arith.constant dense<0.000000e+00> : vector<8x32xf32>
    %229 = tpu.matmul %226, %228, %cst_69 {dimension_numbers = #tpu.dot_dimension_numbers<[1], [0], [0], [1], [0, 0, 1, 1], [], []>} : vector<8x32xf32>, vector<32x32xf32>, vector<8x32xf32> -> vector<8x32xf32>
    %230 = arith.addf %134, %229 : vector<8x32xf32>
    %c1_70 = arith.constant 1 : index
    %c0_71 = arith.constant 0 : index
    %c0_72 = arith.constant 0 : index
    %231 = vector.load %arg8[%c1_70, %c0_71, %c0_72] : memref<2x1x32xf32, #tpu.memory_space<vmem>>, vector<1x1x32xf32>
    %232 = vector.shape_cast %231 : vector<1x1x32xf32> to vector<1x32xf32>
    %233 = arith.mulf %230, %230 : vector<8x32xf32>
    %cst_73 = arith.constant dense<0.000000e+00> : vector<8xf32>
    %234 = vector.multi_reduction <add>, %233, %cst_73 [1] : vector<8x32xf32> to vector<8xf32>
    %235 = vector.shape_cast %234 : vector<8xf32> to vector<8x1xf32>
    %cst_74 = arith.constant 3.200000e+01 : f32
    %236 = vector.broadcast %cst_74 : f32 to vector<8x1xf32>
    %237 = arith.divf %235, %236 : vector<8x1xf32>
    %cst_75 = arith.constant 9.99999997E-7 : f32
    %238 = vector.broadcast %cst_75 : f32 to vector<8x1xf32>
    %239 = arith.addf %237, %238 : vector<8x1xf32>
    %240 = math.rsqrt %239 : vector<8x1xf32>
    %241 = vector.broadcast %240 : vector<8x1xf32> to vector<8x32xf32>
    %242 = arith.mulf %230, %241 : vector<8x32xf32>
    %243 = vector.broadcast %232 : vector<1x32xf32> to vector<8x32xf32>
    %244 = arith.mulf %242, %243 : vector<8x32xf32>
    %c1_76 = arith.constant 1 : index
    %c0_77 = arith.constant 0 : index
    %c0_78 = arith.constant 0 : index
    %245 = vector.load %arg9[%c1_76, %c0_77, %c0_78] : memref<2x32x128xf32, #tpu.memory_space<vmem>>, vector<1x32x128xf32>
    %246 = vector.shape_cast %245 : vector<1x32x128xf32> to vector<32x128xf32>
    %cst_79 = arith.constant dense<0.000000e+00> : vector<8x128xf32>
    %247 = tpu.matmul %244, %246, %cst_79 {dimension_numbers = #tpu.dot_dimension_numbers<[1], [0], [0], [1], [0, 0, 1, 1], [], []>} : vector<8x32xf32>, vector<32x128xf32>, vector<8x128xf32> -> vector<8x128xf32>
    %248 = vector.extract_strided_slice %247 {offsets = [0, 0], sizes = [8, 64], strides = [1, 1]} : vector<8x128xf32> to vector<8x64xf32>
    %249 = vector.extract_strided_slice %247 {offsets = [0, 64], sizes = [8, 64], strides = [1, 1]} : vector<8x128xf32> to vector<8x64xf32>
    %250 = arith.negf %248 : vector<8x64xf32>
    %251 = math.exp %250 : vector<8x64xf32>
    %cst_80 = arith.constant 1.000000e+00 : f32
    %252 = vector.broadcast %cst_80 : f32 to vector<8x64xf32>
    %253 = arith.addf %252, %251 : vector<8x64xf32>
    %254 = arith.divf %252, %253 : vector<8x64xf32>
    %255 = arith.mulf %248, %254 : vector<8x64xf32>
    %256 = arith.mulf %255, %249 : vector<8x64xf32>
    %c1_81 = arith.constant 1 : index
    %c0_82 = arith.constant 0 : index
    %c0_83 = arith.constant 0 : index
    %257 = vector.load %arg10[%c1_81, %c0_82, %c0_83] : memref<2x64x32xf32, #tpu.memory_space<vmem>>, vector<1x64x32xf32>
    %258 = vector.shape_cast %257 : vector<1x64x32xf32> to vector<64x32xf32>
    %cst_84 = arith.constant dense<0.000000e+00> : vector<8x32xf32>
    %259 = tpu.matmul %256, %258, %cst_84 {dimension_numbers = #tpu.dot_dimension_numbers<[1], [0], [0], [1], [0, 0, 1, 1], [], []>} : vector<8x64xf32>, vector<64x32xf32>, vector<8x32xf32> -> vector<8x32xf32>
    %260 = arith.addf %230, %259 : vector<8x32xf32>
    %c0_85 = arith.constant 0 : index
    %c0_86 = arith.constant 0 : index
    %261 = vector.load %arg11[%c0_85, %c0_86] : memref<8x32xf32, #tpu.memory_space<vmem>>, vector<8x32xf32>
    tpu.vector_store %arg11[%c0_85, %c0_86], %260 {strides = array<i32>} : memref<8x32xf32, #tpu.memory_space<vmem>>, vector<8x32xf32>,
    return
  }
}

</mosaic_0001>

<llo_original>
// kernel: block_forward.1
$region0: #{block_forward.1}
  #allocation0 [shape = 'u32[]', space=smem, size = 0x4, offset = 0x4, fixed_abs, tag = 'smem constant byte address 0x4 - core index']
  #allocation1 [shape = 'u32[144,128]{1,0:T(1,128)}', space=vmem, size = 0x12000, scoped, tag = 'internal scratch']
  %s0 = inlined_call_operand.vmem [shape: f32[8,32], index: 0, kind: input, shape index: {}]
  %s1 = inlined_call_operand.vmem [shape: f32[16,8], index: 1, kind: input, shape index: {}]
  %s2 = inlined_call_operand.vmem [shape: f32[16,8], index: 2, kind: input, shape index: {}]
  %s3 = inlined_call_operand.vmem [shape: f32[16,8], index: 3, kind: input, shape index: {}]
  %s4 = inlined_call_operand.vmem [shape: f32[2,1,32], index: 4, kind: input, shape index: {}]
  %s5 = inlined_call_operand.vmem [shape: f32[2,32,64], index: 5, kind: input, shape index: {}]
  %s6 = inlined_call_operand.vmem [shape: f32[2,1,64], index: 6, kind: input, shape index: {}]
  %s7 = inlined_call_operand.vmem [shape: f32[2,32,32], index: 7, kind: input, shape index: {}]
  %s8 = inlined_call_operand.vmem [shape: f32[2,1,32], index: 8, kind: input, shape index: {}]
  %s9 = inlined_call_operand.vmem [shape: f32[2,32,128], index: 9, kind: input, shape index: {}]
  %s10 = inlined_call_operand.vmem [shape: f32[2,64,32], index: 10, kind: input, shape index: {}]
  %s11 = inlined_call_operand.hbm [shape: f32[8,32], index: 11, kind: output, shape index: {0}]
  %s12 = inlined_call_operand.vmem [shape: f32[2,8,32], index: 12, kind: output, shape index: {1}]
  %13 = xla_tuple %s11, %s12
  %s14 = sld [smem:[#allocation0]]
  $region62: #{block_forward.1} parent=0
    _
  %s16 = ssub.s32 1, %s14
  %s17 = scalar_select 0, %s16, %s14
  $region1: #{block_forward.1} parent=0
    #allocation2 [shape = 'u8[4096]{0}', space=vmem, size = 0x1000, scoped, tag = 'output window, operand 0, single buffered']
    #allocation3 [shape = 's32[1]{0}', space=sflag, size = 0x4, scoped, tag = 'scoped memory for block_forward.1']
    %18 = vsyncpa [#allocation3], 0
    // Predicated region
    $region2: #{block_forward.1} parent=1 // pred_check
      _
    $region3: #{block_forward.1} parent=1 // pred_check_branch
      %20 = sbr.rel (0) target = $region5
    $region4: #{block_forward.1} parent=1 // pred_region
      _
    $region5: #{block_forward.1} parent=1 // pred_fallthru
      _
    // Predicated region
    $region6: #{block_forward.1} parent=1 // pred_check
      _
    $region7: #{block_forward.1} parent=1 // pred_check_branch
      %22 = sbr.rel (0) target = $region9
    $region8: #{block_forward.1} parent=1 // pred_region
      _
    $region9: #{block_forward.1} parent=1 // pred_fallthru
      _
    // Predicated region
    $region10: #{block_forward.1} parent=1 // pred_check
      _
    $region11: #{block_forward.1} parent=1 // pred_check_branch
      %24 = sbr.rel (0) target = $region13
    $region12: #{block_forward.1} parent=1 // pred_region
      _
    $region13: #{block_forward.1} parent=1 // pred_fallthru
      _
    // Predicated region
    $region14: #{block_forward.1} parent=1 // pred_check
      _
    $region15: #{block_forward.1} parent=1 // pred_check_branch
      %26 = sbr.rel (0) target = $region17
    $region16: #{block_forward.1} parent=1 // pred_region
      _
    $region17: #{block_forward.1} parent=1 // pred_fallthru
      _
    // Predicated region
    $region18: #{block_forward.1} parent=1 // pred_check
      _
    $region19: #{block_forward.1} parent=1 // pred_check_branch
      %28 = sbr.rel (0) target = $region21
    $region20: #{block_forward.1} parent=1 // pred_region
      _
    $region21: #{block_forward.1} parent=1 // pred_fallthru
      _
    // Predicated region
    $region22: #{block_forward.1} parent=1 // pred_check
      _
    $region23: #{block_forward.1} parent=1 // pred_check_branch
      %30 = sbr.rel (0) target = $region25
    $region24: #{block_forward.1} parent=1 // pred_region
      _
    $region25: #{block_forward.1} parent=1 // pred_fallthru
      _
    // Predicated region
    $region26: #{block_forward.1} parent=1 // pred_check
      _
    $region27: #{block_forward.1} parent=1 // pred_check_branch
      %32 = sbr.rel (0) target = $region29
    $region28: #{block_forward.1} parent=1 // pred_region
      _
    $region29: #{block_forward.1} parent=1 // pred_fallthru
      _
    // Predicated region
    $region30: #{block_forward.1} parent=1 // pred_check
      _
    $region31: #{block_forward.1} parent=1 // pred_check_branch
      %34 = sbr.rel (0) target = $region33
    $region32: #{block_forward.1} parent=1 // pred_region
      _
    $region33: #{block_forward.1} parent=1 // pred_fallthru
      _
    // Predicated region
    $region34: #{block_forward.1} parent=1 // pred_check
      _
    $region35: #{block_forward.1} parent=1 // pred_check_branch
      %36 = sbr.rel (0) target = $region37
    $region36: #{block_forward.1} parent=1 // pred_region
      _
    $region37: #{block_forward.1} parent=1 // pred_fallthru
      _
    // Predicated region
    $region38: #{block_forward.1} parent=1 // pred_check
      _
    $region39: #{block_forward.1} parent=1 // pred_check_branch
      %38 = sbr.rel (0) target = $region41
    $region40: #{block_forward.1} parent=1 // pred_region
      _
    $region41: #{block_forward.1} parent=1 // pred_fallthru
      _
    // Predicated region
    $region42: #{block_forward.1} parent=1 // pred_check
      _
    $region43: #{block_forward.1} parent=1 // pred_check_branch
      %40 = sbr.rel (0) target = $region45
    $region44: #{block_forward.1} parent=1 // pred_region
      _
    $region45: #{block_forward.1} parent=1 // pred_fallthru
      _
    %v41 = vld [vmem:[%s0] sm:$0xff]
    %v42 = vld [vmem:[%s1] sm:$0xff]
    %v43 = vld [vmem:[%s1 + $0x8] sm:$0xff]
    %v44 = vld [vmem:[%s2] sm:$0xff]
    %v45 = vld [vmem:[%s2 + $0x8] sm:$0xff]
    %v46 = vld [vmem:[%s3] sm:$0xff]
    %v47 = vld [vmem:[%s3 + $0x8] sm:$0xff]
    %v48 = vld [vmem:[%s4] sm:$0x1]
    %v49 = vmul.f32 %v41, %v41
    %vm50 = vcmask 261120
    %v51 = vsel %vm50, %v49, 0.0
    %52 = vadd.xlane.f32.xlu0 %v51
    %v53 = vpop.xlane.xlu0 %52
    %v54 = vrcp.pop 32.0
    %v55 = vmul.f32 %v53, %v54
    %v56 = vadd.f32 %v55, 1e-06
    %v57 = vrsqrt.pop %v56
    %v58 = vmul.f32 %v41, %v57
    %v60 = vlaneseq
    %v61 = vshrl.u32 %v60, 7
    %v62 = vsub.s32 0, %v61
    %v63 = vrot.slane %v48, %v62
    %v65 = vmul.f32 %v58, %v63
    %v66 = vld [vmem:[%s5] sm:$0xff]
    %v67 = vld [vmem:[%s5 + $0x8] sm:$0xff]
    %v68 = vld [vmem:[%s5 + $0x10] sm:$0xff]
    %v69 = vld [vmem:[%s5 + $0x18] sm:$0xff]
    %v70 = vld [vmem:[%s6] sm:$0x1]
    %v72 = vlaneseq
    %v73 = vshrl.u32 %v72, 7
    %v74 = vsub.s32 0, %v73
    %v75 = vrot.slane %v70, %v74
    %v78 = vsel %vm50, %v65, 0
    %80 = vmatprep.subr.mxu0 0.0
    %81 = vmatpush1.msra.mxu0 %v66
    %82 = vmatprep.subr.mxu0 0.0
    %83 = vmatpush1.msra.mxu0 %v67
    %84 = vmatprep.subr.mxu0 0.0
    %85 = vmatpush1.msra.mxu0 %v68
    %86 = vmatprep.subr.mxu0 0.0
    %87 = vmatpush1.msra.mxu0 %v69
    %88 = vmatprep.subr.mxu0 0.0
    %89 = vmatpush1.msra.mxu0 0.0
    %90 = vmatprep.subr.mxu0 0.0
    %91 = vmatpush1.msra.mxu0 0.0
    %92 = vmatprep.subr.mxu0 0.0
    %93 = vmatpush1.msra.mxu0 0.0
    %94 = vmatprep.subr.mxu0 0.0
    %95 = vmatpush1.msra.mxu0 0.0
    %96 = vmatprep.subr.mxu0 0.0
    %97 = vmatpush1.msra.mxu0 0.0
    %98 = vmatprep.subr.mxu0 0.0
    %99 = vmatpush1.msra.mxu0 0.0
    %100 = vmatprep.subr.mxu0 0.0
    %101 = vmatpush1.msra.mxu0 0.0
    %102 = vmatprep.subr.mxu0 0.0
    %103 = vmatpush1.msra.mxu0 0.0
    %104 = vmatprep.subr.mxu0 0.0
    %105 = vmatpush1.msra.mxu0 0.0
    %106 = vmatprep.subr.mxu0 0.0
    %107 = vmatpush1.msra.mxu0 0.0
    %108 = vmatprep.subr.mxu0 0.0
    %109 = vmatpush1.msra.mxu0 0.0
    %110 = vmatprep.subr.mxu0 0.0
    %111 = vmatpush1.msra.mxu0 0.0
    %112 = vmatprep.subr.mxu0 0.0
    %113 = vmatpush1.msra.mxu0 0.0
    %114 = vmatprep.subr.mxu0 0.0
    %115 = vmatpush1.msra.mxu0 0.0
    %116 = vmatprep.subr.mxu0 0.0
    %117 = vmatpush1.msra.mxu0 0.0
    %118 = vmatprep.subr.mxu0 0.0
    %119 = vmatpush1.msra.mxu0 0.0
    %120 = vmatprep.subr.mxu0 0.0
    %121 = vmatpush1.msra.mxu0 0.0
    %122 = vmatprep.subr.mxu0 0.0
    %123 = vmatpush1.msra.mxu0 0.0
    %124 = vmatprep.subr.mxu0 0.0
    %125 = vmatpush1.msra.mxu0 0.0
    %126 = vmatprep.subr.mxu0 0.0
    %127 = vmatpush1.msra.mxu0 0.0
    %128 = vmatprep.subr.mxu0 0.0
    %129 = vmatpush1.msra.mxu0 0.0
    %130 = vmatprep.subr.mxu0 0.0
    %131 = vmatpush1.msra.mxu0 0.0
    %132 = vmatprep.subr.mxu0 0.0
    %133 = vmatpush1.msra.mxu0 0.0
    %134 = vmatprep.subr.mxu0 0.0
    %135 = vmatpush1.msra.mxu0 0.0
    %136 = vmatprep.subr.mxu0 0.0
    %137 = vmatpush1.msra.mxu0 0.0
    %138 = vmatprep.subr.mxu0 0.0
    %139 = vmatpush1.msra.mxu0 0.0
    %140 = vmatprep.subr.mxu0 0.0
    %141 = vmatpush1.msra.mxu0 0.0
    %142 = vmatprep.subr.mxu0 0.0
    %143 = vmatpush1.msra.mxu0 0.0
    %144 = vmatprep.mubr.f32.mxu0 0.0
    %145 = vmatmul.mubr.f32.gmra.mrb[0].mxu0 %v78
    %v146 = vpop.f32.mrb[0].mxu0
    %v147 = vadd.f32 %v75, %v146
    %v148 = vpop.f32.mrb[0].mxu0
    %149 = vdwg.mxu0
    %151 = vrot.lane.b32.xlu0 %v147, 120
    %v152 = vpop.permute.xlu0 %151
    %154 = vrot.lane.b32.xlu0 %v147, 112
    %v155 = vpop.permute.xlu0 %154
    %156 = vrot.lane.b32.xlu0 %v152, 112
    %v157 = vpop.permute.xlu0 %156
    %v160 = vmul.f32 %v147, %v42
    %v161 = vmul.f32 %v152, %v43
    %v162 = vmul.f32 %v155, %v42
    %v163 = vmul.f32 %v157, %v43
    %164 = vrot.lane.b32.xlu0 %v147, 124
    %v165 = vpop.permute.xlu0 %164
    %166 = vrot.lane.b32.xlu0 %v152, 124
    %v167 = vpop.permute.xlu0 %166
    %168 = vrot.lane.b32.xlu0 %v155, 124
    %v169 = vpop.permute.xlu0 %168
    %170 = vrot.lane.b32.xlu0 %v157, 124
    %v171 = vpop.permute.xlu0 %170
    %176 = vrot.lane.b32.xlu0 %v147, 4
    %v177 = vpop.permute.xlu0 %176
    %178 = vrot.lane.b32.xlu0 %v152, 4
    %v179 = vpop.permute.xlu0 %178
    %180 = vrot.lane.b32.xlu0 %v155, 4
    %v181 = vpop.permute.xlu0 %180
    %182 = vrot.lane.b32.xlu0 %v157, 4
    %v183 = vpop.permute.xlu0 %182
    %vm188 = vcmask 31744
    %v189 = vsel %vm188, %v165, %v177
    %v190 = vsel %vm188, %v167, %v179
    %v191 = vsel %vm188, %v169, %v181
    %v192 = vsel %vm188, %v171, %v183
    %v193 = vmul.f32 %v189, %v44
    %v194 = vmul.f32 %v190, %v45
    %v195 = vmul.f32 %v191, %v44
    %v196 = vmul.f32 %v192, %v45
    %v197 = vadd.f32 %v160, %v193
    %v198 = vadd.f32 %v161, %v194
    %v199 = vadd.f32 %v162, %v195
    %v200 = vadd.f32 %v163, %v196
    %202 = vrot.lane.b32.xlu0 %v42, 32
    %v203 = vpop.permute.xlu0 %202
    %v205 = vmul.f32 %v147, %v203
    %v206 = vmul.f32 %v152, %v203
    %207 = vrot.lane.b32.xlu0 %v147, 92
    %v208 = vpop.permute.xlu0 %207
    %209 = vrot.lane.b32.xlu0 %v152, 92
    %v210 = vpop.permute.xlu0 %209
    %213 = vrot.lane.b32.xlu0 %v147, 100
    %v214 = vpop.permute.xlu0 %213
    %215 = vrot.lane.b32.xlu0 %v152, 100
    %v216 = vpop.permute.xlu0 %215
    %v219 = vsel %vm188, %v208, %v214
    %v220 = vsel %vm188, %v210, %v216
    %v221 = vmul.f32 %v219, %v44
    %v222 = vmul.f32 %v220, %v44
    %225 = vrot.lane.b32.xlu0 %v221, 32
    %v226 = vpop.permute.xlu0 %225
    %227 = vrot.lane.b32.xlu0 %v222, 32
    %v228 = vpop.permute.xlu0 %227
    %v231 = vadd.f32 %v205, %v226
    %v232 = vadd.f32 %v206, %v228
    %234 = vrot.lane.b32.xlu0 %v231, 96
    %v235 = vpop.permute.xlu0 %234
    %238 = vrot.lane.b32.xlu0 %v232, 104
    %v239 = vpop.permute.xlu0 %238
    %241 = vrot.lane.b32.xlu0 %v147, 96
    %v242 = vpop.permute.xlu0 %241
    %vm244 = vcmask 64512
    %v245 = vsel %vm244, %v235, %v239
    %vm246 = vcmask 130048
    %v247 = vsel %vm246, %v245, %v242
    %248 = vst.msk [vmem:[%s12] sm:$0xff] %vm50, %v247
    %v250 = vsel %vm244, %v197, 0
    %v253 = vsel %vm244, %v198, 0
    %v255 = vsel %vm244, %v235, 0
    %257 = vmatprep.subr.mxu0 0.0
    %258 = vmatpush1.xpose.msra.mxu0 %v255
    %259 = vmatprep.subr.mxu0 0.0
    %260 = vmatpush1.xpose.msra.mxu0 0.0
    %261 = vmatprep.subr.mxu0 0.0
    %262 = vmatpush1.xpose.msra.mxu0 0.0
    %263 = vmatprep.subr.mxu0 0.0
    %264 = vmatpush1.xpose.msra.mxu0 0.0
    %265 = vmatprep.subr.mxu0 0.0
    %266 = vmatpush1.xpose.msra.mxu0 0.0
    %267 = vmatprep.subr.mxu0 0.0
    %268 = vmatpush1.xpose.msra.mxu0 0.0
    %269 = vmatprep.subr.mxu0 0.0
    %270 = vmatpush1.xpose.msra.mxu0 0.0
    %271 = vmatprep.subr.mxu0 0.0
    %272 = vmatpush1.xpose.msra.mxu0 0.0
    %273 = vmatprep.subr.mxu0 0.0
    %274 = vmatpush1.xpose.msra.mxu0 0.0
    %275 = vmatprep.subr.mxu0 0.0
    %276 = vmatpush1.xpose.msra.mxu0 0.0
    %277 = vmatprep.subr.mxu0 0.0
    %278 = vmatpush1.xpose.msra.mxu0 0.0
    %279 = vmatprep.subr.mxu0 0.0
    %280 = vmatpush1.xpose.msra.mxu0 0.0
    %281 = vmatprep.subr.mxu0 0.0
    %282 = vmatpush1.xpose.msra.mxu0 0.0
    %283 = vmatprep.subr.mxu0 0.0
    %284 = vmatpush1.xpose.msra.mxu0 0.0
    %285 = vmatprep.subr.mxu0 0.0
    %286 = vmatpush1.xpose.msra.mxu0 0.0
    %287 = vmatprep.subr.mxu0 0.0
    %288 = vmatpush1.xpose.msra.mxu0 0.0
    %289 = vmatprep.subr.mxu0 0.0
    %290 = vmatpush1.xpose.msra.mxu0 0.0
    %291 = vmatprep.subr.mxu0 0.0
    %292 = vmatpush1.xpose.msra.mxu0 0.0
    %293 = vmatprep.subr.mxu0 0.0
    %294 = vmatpush1.xpose.msra.mxu0 0.0
    %295 = vmatprep.subr.mxu0 0.0
    %296 = vmatpush1.xpose.msra.mxu0 0.0
    %297 = vmatprep.subr.mxu0 0.0
    %298 = vmatpush1.xpose.msra.mxu0 0.0
    %299 = vmatprep.subr.mxu0 0.0
    %300 = vmatpush1.xpose.msra.mxu0 0.0
    %301 = vmatprep.subr.mxu0 0.0
    %302 = vmatpush1.xpose.msra.mxu0 0.0
    %303 = vmatprep.subr.mxu0 0.0
    %304 = vmatpush1.xpose.msra.mxu0 0.0
    %305 = vmatprep.subr.mxu0 0.0
    %306 = vmatpush1.xpose.msra.mxu0 0.0
    %307 = vmatprep.subr.mxu0 0.0
    %308 = vmatpush1.xpose.msra.mxu0 0.0
    %309 = vmatprep.subr.mxu0 0.0
    %310 = vmatpush1.xpose.msra.mxu0 0.0
    %311 = vmatprep.subr.mxu0 0.0
    %312 = vmatpush1.xpose.msra.mxu0 0.0
    %313 = vmatprep.subr.mxu0 0.0
    %314 = vmatpush1.xpose.msra.mxu0 0.0
    %315 = vmatprep.subr.mxu0 0.0
    %316 = vmatpush1.xpose.msra.mxu0 0.0
    %317 = vmatprep.subr.mxu0 0.0
    %318 = vmatpush1.xpose.msra.mxu0 0.0
    %319 = vmatprep.subr.mxu0 0.0
    %320 = vmatpush1.xpose.msra.mxu0 0.0
    %321 = vmatprep.mubr.f32.mxu0 0.0
    %322 = vmatmul.mubr.f32.gmra.mrb[0].mxu0 %v250
    %v323 = vpop.f32.mrb[0].mxu0
    %v324 = vadd.f32 0.0, %v323
    %v325 = vpop.f32.mrb[0].mxu0
    %326 = vmatprep.mubr.f32.mxu0 0.0
    %327 = vmatmul.mubr.f32.gmra.mrb[0].mxu0 %v253
    %v328 = vpop.f32.mrb[0].mxu0
    %v329 = vadd.f32 0.0, %v328
    %v330 = vpop.f32.mrb[0].mxu0
    %331 = vdwg.mxu0
    %332 = vrot.lane.b32.xlu0 %v232, 96
    %v333 = vpop.permute.xlu0 %332
    %v335 = vsel %vm244, %v199, 0
    %v338 = vsel %vm244, %v200, 0
    %v340 = vsel %vm244, %v333, 0
    %342 = vmatprep.subr.mxu0 0.0
    %343 = vmatpush1.xpose.msra.mxu0 %v340
    %344 = vmatprep.subr.mxu0 0.0
    %345 = vmatpush1.xpose.msra.mxu0 0.0
    %346 = vmatprep.subr.mxu0 0.0
    %347 = vmatpush1.xpose.msra.mxu0 0.0
    %348 = vmatprep.subr.mxu0 0.0
    %349 = vmatpush1.xpose.msra.mxu0 0.0
    %350 = vmatprep.subr.mxu0 0.0
    %351 = vmatpush1.xpose.msra.mxu0 0.0
    %352 = vmatprep.subr.mxu0 0.0
    %353 = vmatpush1.xpose.msra.mxu0 0.0
    %354 = vmatprep.subr.mxu0 0.0
    %355 = vmatpush1.xpose.msra.mxu0 0.0
    %356 = vmatprep.subr.mxu0 0.0
    %357 = vmatpush1.xpose.msra.mxu0 0.0
    %358 = vmatprep.subr.mxu0 0.0
    %359 = vmatpush1.xpose.msra.mxu0 0.0
    %360 = vmatprep.subr.mxu0 0.0
    %361 = vmatpush1.xpose.msra.mxu0 0.0
    %362 = vmatprep.subr.mxu0 0.0
    %363 = vmatpush1.xpose.msra.mxu0 0.0
    %364 = vmatprep.subr.mxu0 0.0
    %365 = vmatpush1.xpose.msra.mxu0 0.0
    %366 = vmatprep.subr.mxu0 0.0
    %367 = vmatpush1.xpose.msra.mxu0 0.0
    %368 = vmatprep.subr.mxu0 0.0
    %369 = vmatpush1.xpose.msra.mxu0 0.0
    %370 = vmatprep.subr.mxu0 0.0
    %371 = vmatpush1.xpose.msra.mxu0 0.0
    %372 = vmatprep.subr.mxu0 0.0
    %373 = vmatpush1.xpose.msra.mxu0 0.0
    %374 = vmatprep.subr.mxu0 0.0
    %375 = vmatpush1.xpose.msra.mxu0 0.0
    %376 = vmatprep.subr.mxu0 0.0
    %377 = vmatpush1.xpose.msra.mxu0 0.0
    %378 = vmatprep.subr.mxu0 0.0
    %379 = vmatpush1.xpose.msra.mxu0 0.0
    %380 = vmatprep.subr.mxu0 0.0
    %381 = vmatpush1.xpose.msra.mxu0 0.0
    %382 = vmatprep.subr.mxu0 0.0
    %383 = vmatpush1.xpose.msra.mxu0 0.0
    %384 = vmatprep.subr.mxu0 0.0
    %385 = vmatpush1.xpose.msra.mxu0 0.0
    %386 = vmatprep.subr.mxu0 0.0
    %387 = vmatpush1.xpose.msra.mxu0 0.0
    %388 = vmatprep.subr.mxu0 0.0
    %389 = vmatpush1.xpose.msra.mxu0 0.0
    %390 = vmatprep.subr.mxu0 0.0
    %391 = vmatpush1.xpose.msra.mxu0 0.0
    %392 = vmatprep.subr.mxu0 0.0
    %393 = vmatpush1.xpose.msra.mxu0 0.0
    %394 = vmatprep.subr.mxu0 0.0
    %395 = vmatpush1.xpose.msra.mxu0 0.0
    %396 = vmatprep.subr.mxu0 0.0
    %397 = vmatpush1.xpose.msra.mxu0 0.0
    %398 = vmatprep.subr.mxu0 0.0
    %399 = vmatpush1.xpose.msra.mxu0 0.0
    %400 = vmatprep.subr.mxu0 0.0
    %401 = vmatpush1.xpose.msra.mxu0 0.0
    %402 = vmatprep.subr.mxu0 0.0
    %403 = vmatpush1.xpose.msra.mxu0 0.0
    %404 = vmatprep.subr.mxu0 0.0
    %405 = vmatpush1.xpose.msra.mxu0 0.0
    %406 = vmatprep.mubr.f32.mxu0 0.0
    %407 = vmatmul.mubr.f32.gmra.mrb[0].mxu0 %v335
    %v408 = vpop.f32.mrb[0].mxu0
    %v409 = vadd.f32 0.0, %v408
    %v410 = vpop.f32.mrb[0].mxu0
    %411 = vmatprep.mubr.f32.mxu0 0.0
    %412 = vmatmul.mubr.f32.gmra.mrb[0].mxu0 %v338
    %v413 = vpop.f32.mrb[0].mxu0
    %v414 = vadd.f32 0.0, %v413
    %v415 = vpop.f32.mrb[0].mxu0
    %416 = vdwg.mxu0
    %v417 = vmul.f32 %v324, 0.35355338
    %v418 = vmul.f32 %v329, 0.35355338
    %v419 = vmul.f32 %v409, 0.35355338
    %v420 = vmul.f32 %v414, 0.35355338
    %v421 = vadd.f32 %v417, %v46
    %v422 = vadd.f32 %v418, %v47
    %v423 = vadd.f32 %v419, %v46
    %v424 = vadd.f32 %v420, %v47
    %v425 = vsel %vm244, %v421, -inf
    %426 = vmax.xlane.f32.xlu0 %v425
    %v427 = vpop.xlane.xlu0 %426
    %v428 = vsel %vm244, %v422, -inf
    %429 = vmax.xlane.f32.xlu0 %v428
    %v430 = vpop.xlane.xlu0 %429
    %v431 = vsel %vm244, %v423, -inf
    %432 = vmax.xlane.f32.xlu0 %v431
    %v433 = vpop.xlane.xlu0 %432
    %v434 = vsel %vm244, %v424, -inf
    %435 = vmax.xlane.f32.xlu0 %v434
    %v436 = vpop.xlane.xlu0 %435
    %v437 = vsub.f32 %v421, %v427
    %v438 = vsub.f32 %v422, %v430
    %v439 = vsub.f32 %v423, %v433
    %v440 = vsub.f32 %v424, %v436
    %v441 = vmul.f32 %v437, 1.442695
    %v442 = vpow.pop %v441
    %v443 = vmul.f32 %v438, 1.442695
    %v444 = vpow.pop %v443
    %v445 = vmul.f32 %v439, 1.442695
    %v446 = vpow.pop %v445
    %v447 = vmul.f32 %v440, 1.442695
    %v448 = vpow.pop %v447
    %v449 = vsel %vm244, %v442, 0.0
    %450 = vadd.xlane.f32.xlu0 %v449
    %v451 = vpop.xlane.xlu0 %450
    %v452 = vsel %vm244, %v444, 0.0
    %453 = vadd.xlane.f32.xlu0 %v452
    %v454 = vpop.xlane.xlu0 %453
    %v455 = vsel %vm244, %v446, 0.0
    %456 = vadd.xlane.f32.xlu0 %v455
    %v457 = vpop.xlane.xlu0 %456
    %v458 = vsel %vm244, %v448, 0.0
    %459 = vadd.xlane.f32.xlu0 %v458
    %v460 = vpop.xlane.xlu0 %459
    %v461 = vrcp.pop %v451
    %v462 = vrcp.pop %v454
    %v463 = vrcp.pop %v457
    %v464 = vrcp.pop %v460
    %v465 = vmul.f32 %v442, %v461
    %v466 = vmul.f32 %v444, %v462
    %v467 = vmul.f32 %v446, %v463
    %v468 = vmul.f32 %v448, %v464
    %469 = vrot.lane.b32.xlu0 %v147, 80
    %v470 = vpop.permute.xlu0 %469
    %v473 = vsel %vm244, %v465, 0
    %v476 = vsel %vm244, %v466, 0
    %478 = vmatprep.subr.mxu0 0.0
    %479 = vmatpush1.msra.mxu0 %v470
    %480 = vmatprep.subr.mxu0 0.0
    %481 = vmatpush1.msra.mxu0 0.0
    %482 = vmatprep.subr.mxu0 0.0
    %483 = vmatpush1.msra.mxu0 0.0
    %484 = vmatprep.subr.mxu0 0.0
    %485 = vmatpush1.msra.mxu0 0.0
    %486 = vmatprep.subr.mxu0 0.0
    %487 = vmatpush1.msra.mxu0 0.0
    %488 = vmatprep.subr.mxu0 0.0
    %489 = vmatpush1.msra.mxu0 0.0
    %490 = vmatprep.subr.mxu0 0.0
    %491 = vmatpush1.msra.mxu0 0.0
    %492 = vmatprep.subr.mxu0 0.0
    %493 = vmatpush1.msra.mxu0 0.0
    %494 = vmatprep.subr.mxu0 0.0
    %495 = vmatpush1.msra.mxu0 0.0
    %496 = vmatprep.subr.mxu0 0.0
    %497 = vmatpush1.msra.mxu0 0.0
    %498 = vmatprep.subr.mxu0 0.0
    %499 = vmatpush1.msra.mxu0 0.0
    %500 = vmatprep.subr.mxu0 0.0
    %501 = vmatpush1.msra.mxu0 0.0
    %502 = vmatprep.subr.mxu0 0.0
    %503 = vmatpush1.msra.mxu0 0.0
    %504 = vmatprep.subr.mxu0 0.0
    %505 = vmatpush1.msra.mxu0 0.0
    %506 = vmatprep.subr.mxu0 0.0
    %507 = vmatpush1.msra.mxu0 0.0
    %508 = vmatprep.subr.mxu0 0.0
    %509 = vmatpush1.msra.mxu0 0.0
    %510 = vmatprep.subr.mxu0 0.0
    %511 = vmatpush1.msra.mxu0 0.0
    %512 = vmatprep.subr.mxu0 0.0
    %513 = vmatpush1.msra.mxu0 0.0
    %514 = vmatprep.subr.mxu0 0.0
    %515 = vmatpush1.msra.mxu0 0.0
    %516 = vmatprep.subr.mxu0 0.0
    %517 = vmatpush1.msra.mxu0 0.0
    %518 = vmatprep.subr.mxu0 0.0
    %519 = vmatpush1.msra.mxu0 0.0
    %520 = vmatprep.subr.mxu0 0.0
    %521 = vmatpush1.msra.mxu0 0.0
    %522 = vmatprep.subr.mxu0 0.0
    %523 = vmatpush1.msra.mxu0 0.0
    %524 = vmatprep.subr.mxu0 0.0
    %525 = vmatpush1.msra.mxu0 0.0
    %526 = vmatprep.subr.mxu0 0.0
    %527 = vmatpush1.msra.mxu0 0.0
    %528 = vmatprep.subr.mxu0 0.0
    %529 = vmatpush1.msra.mxu0 0.0
    %530 = vmatprep.subr.mxu0 0.0
    %531 = vmatpush1.msra.mxu0 0.0
    %532 = vmatprep.subr.mxu0 0.0
    %533 = vmatpush1.msra.mxu0 0.0
    %534 = vmatprep.subr.mxu0 0.0
    %535 = vmatpush1.msra.mxu0 0.0
    %536 = vmatprep.subr.mxu0 0.0
    %537 = vmatpush1.msra.mxu0 0.0
    %538 = vmatprep.subr.mxu0 0.0
    %539 = vmatpush1.msra.mxu0 0.0
    %540 = vmatprep.subr.mxu0 0.0
    %541 = vmatpush1.msra.mxu0 0.0
    %542 = vmatprep.mubr.f32.mxu0 0.0
    %543 = vmatmul.mubr.f32.gmra.mrb[0].mxu0 %v473
    %v544 = vpop.f32.mrb[0].mxu0
    %v545 = vadd.f32 0.0, %v544
    %v546 = vpop.f32.mrb[0].mxu0
    %547 = vmatprep.mubr.f32.mxu0 0.0
    %548 = vmatmul.mubr.f32.gmra.mrb[0].mxu0 %v476
    %v549 = vpop.f32.mrb[0].mxu0
    %v550 = vadd.f32 0.0, %v549
    %v551 = vpop.f32.mrb[0].mxu0
    %552 = vdwg.mxu0
    %553 = vrot.lane.b32.xlu0 %v152, 80
    %v554 = vpop.permute.xlu0 %553
    %v557 = vsel %vm244, %v467, 0
    %v560 = vsel %vm244, %v468, 0
    %562 = vmatprep.subr.mxu0 0.0
    %563 = vmatpush1.msra.mxu0 %v554
    %564 = vmatprep.subr.mxu0 0.0
    %565 = vmatpush1.msra.mxu0 0.0
    %566 = vmatprep.subr.mxu0 0.0
    %567 = vmatpush1.msra.mxu0 0.0
    %568 = vmatprep.subr.mxu0 0.0
    %569 = vmatpush1.msra.mxu0 0.0
    %570 = vmatprep.subr.mxu0 0.0
    %571 = vmatpush1.msra.mxu0 0.0
    %572 = vmatprep.subr.mxu0 0.0
    %573 = vmatpush1.msra.mxu0 0.0
    %574 = vmatprep.subr.mxu0 0.0
    %575 = vmatpush1.msra.mxu0 0.0
    %576 = vmatprep.subr.mxu0 0.0
    %577 = vmatpush1.msra.mxu0 0.0
    %578 = vmatprep.subr.mxu0 0.0
    %579 = vmatpush1.msra.mxu0 0.0
    %580 = vmatprep.subr.mxu0 0.0
    %581 = vmatpush1.msra.mxu0 0.0
    %582 = vmatprep.subr.mxu0 0.0
    %583 = vmatpush1.msra.mxu0 0.0
    %584 = vmatprep.subr.mxu0 0.0
    %585 = vmatpush1.msra.mxu0 0.0
    %586 = vmatprep.subr.mxu0 0.0
    %587 = vmatpush1.msra.mxu0 0.0
    %588 = vmatprep.subr.mxu0 0.0
    %589 = vmatpush1.msra.mxu0 0.0
    %590 = vmatprep.subr.mxu0 0.0
    %591 = vmatpush1.msra.mxu0 0.0
    %592 = vmatprep.subr.mxu0 0.0
    %593 = vmatpush1.msra.mxu0 0.0
    %594 = vmatprep.subr.mxu0 0.0
    %595 = vmatpush1.msra.mxu0 0.0
    %596 = vmatprep.subr.mxu0 0.0
    %597 = vmatpush1.msra.mxu0 0.0
    %598 = vmatprep.subr.mxu0 0.0
    %599 = vmatpush1.msra.mxu0 0.0
    %600 = vmatprep.subr.mxu0 0.0
    %601 = vmatpush1.msra.mxu0 0.0
    %602 = vmatprep.subr.mxu0 0.0
    %603 = vmatpush1.msra.mxu0 0.0
    %604 = vmatprep.subr.mxu0 0.0
    %605 = vmatpush1.msra.mxu0 0.0
    %606 = vmatprep.subr.mxu0 0.0
    %607 = vmatpush1.msra.mxu0 0.0
    %608 = vmatprep.subr.mxu0 0.0
    %609 = vmatpush1.msra.mxu0 0.0
    %610 = vmatprep.subr.mxu0 0.0
    %611 = vmatpush1.msra.mxu0 0.0
    %612 = vmatprep.subr.mxu0 0.0
    %613 = vmatpush1.msra.mxu0 0.0
    %614 = vmatprep.subr.mxu0 0.0
    %615 = vmatpush1.msra.mxu0 0.0
    %616 = vmatprep.subr.mxu0 0.0
    %617 = vmatpush1.msra.mxu0 0.0
    %618 = vmatprep.subr.mxu0 0.0
    %619 = vmatpush1.msra.mxu0 0.0
    %620 = vmatprep.subr.mxu0 0.0
    %621 = vmatpush1.msra.mxu0 0.0
    %622 = vmatprep.subr.mxu0 0.0
    %623 = vmatpush1.msra.mxu0 0.0
    %624 = vmatprep.subr.mxu0 0.0
    %625 = vmatpush1.msra.mxu0 0.0
    %626 = vmatprep.mubr.f32.mxu0 0.0
    %627 = vmatmul.mubr.f32.gmra.mrb[0].mxu0 %v557
    %v628 = vpop.f32.mrb[0].mxu0
    %v629 = vadd.f32 0.0, %v628
    %v630 = vpop.f32.mrb[0].mxu0
    %631 = vmatprep.mubr.f32.mxu0 0.0
    %632 = vmatmul.mubr.f32.gmra.mrb[0].mxu0 %v560
    %v633 = vpop.f32.mrb[0].mxu0
    %v634 = vadd.f32 0.0, %v633
    %v635 = vpop.f32.mrb[0].mxu0
    %636 = vdwg.mxu0
    %638 = vrot.lane.b32.xlu0 %v550, 8
    %v639 = vpop.permute.xlu0 %638
    %642 = vrot.lane.b32.xlu0 %v629, 16
    %v643 = vpop.permute.xlu0 %642
    %646 = vrot.lane.b32.xlu0 %v634, 24
    %v647 = vpop.permute.xlu0 %646
    %v649 = vsel %vm244, %v545, %v639
    %v650 = vsel %vm246, %v649, %v643
    %vm651 = vcmask 195584
    %v652 = vsel %vm651, %v650, %v647
    %v653 = vld [vmem:[%s7] sm:$0xff]
    %v654 = vld [vmem:[%s7 + $0x8] sm:$0xff]
    %v655 = vld [vmem:[%s7 + $0x10] sm:$0xff]
    %v656 = vld [vmem:[%s7 + $0x18] sm:$0xff]
    %v658 = vsel %vm50, %v652, 0
    %660 = vmatprep.subr.mxu0 0.0
    %661 = vmatpush1.msra.mxu0 %v653
    %662 = vmatprep.subr.mxu0 0.0
    %663 = vmatpush1.msra.mxu0 %v654
    %664 = vmatprep.subr.mxu0 0.0
    %665 = vmatpush1.msra.mxu0 %v655
    %666 = vmatprep.subr.mxu0 0.0
    %667 = vmatpush1.msra.mxu0 %v656
    %668 = vmatprep.subr.mxu0 0.0
    %669 = vmatpush1.msra.mxu0 0.0
    %670 = vmatprep.subr.mxu0 0.0
    %671 = vmatpush1.msra.mxu0 0.0
    %672 = vmatprep.subr.mxu0 0.0
    %673 = vmatpush1.msra.mxu0 0.0
    %674 = vmatprep.subr.mxu0 0.0
    %675 = vmatpush1.msra.mxu0 0.0
    %676 = vmatprep.subr.mxu0 0.0
    %677 = vmatpush1.msra.mxu0 0.0
    %678 = vmatprep.subr.mxu0 0.0
    %679 = vmatpush1.msra.mxu0 0.0
    %680 = vmatprep.subr.mxu0 0.0
    %681 = vmatpush1.msra.mxu0 0.0
    %682 = vmatprep.subr.mxu0 0.0
    %683 = vmatpush1.msra.mxu0 0.0
    %684 = vmatprep.subr.mxu0 0.0
    %685 = vmatpush1.msra.mxu0 0.0
    %686 = vmatprep.subr.mxu0 0.0
    %687 = vmatpush1.msra.mxu0 0.0
    %688 = vmatprep.subr.mxu0 0.0
    %689 = vmatpush1.msra.mxu0 0.0
    %690 = vmatprep.subr.mxu0 0.0
    %691 = vmatpush1.msra.mxu0 0.0
    %692 = vmatprep.subr.mxu0 0.0
    %693 = vmatpush1.msra.mxu0 0.0
    %694 = vmatprep.subr.mxu0 0.0
    %695 = vmatpush1.msra.mxu0 0.0
    %696 = vmatprep.subr.mxu0 0.0
    %697 = vmatpush1.msra.mxu0 0.0
    %698 = vmatprep.subr.mxu0 0.0
    %699 = vmatpush1.msra.mxu0 0.0
    %700 = vmatprep.subr.mxu0 0.0
    %701 = vmatpush1.msra.mxu0 0.0
    %702 = vmatprep.subr.mxu0 0.0
    %703 = vmatpush1.msra.mxu0 0.0
    %704 = vmatprep.subr.mxu0 0.0
    %705 = vmatpush1.msra.mxu0 0.0
    %706 = vmatprep.subr.mxu0 0.0
    %707 = vmatpush1.msra.mxu0 0.0
    %708 = vmatprep.subr.mxu0 0.0
    %709 = vmatpush1.msra.mxu0 0.0
    %710 = vmatprep.subr.mxu0 0.0
    %711 = vmatpush1.msra.mxu0 0.0
    %712 = vmatprep.subr.mxu0 0.0
    %713 = vmatpush1.msra.mxu0 0.0
    %714 = vmatprep.subr.mxu0 0.0
    %715 = vmatpush1.msra.mxu0 0.0
    %716 = vmatprep.subr.mxu0 0.0
    %717 = vmatpush1.msra.mxu0 0.0
    %718 = vmatprep.subr.mxu0 0.0
    %719 = vmatpush1.msra.mxu0 0.0
    %720 = vmatprep.subr.mxu0 0.0
    %721 = vmatpush1.msra.mxu0 0.0
    %722 = vmatprep.subr.mxu0 0.0
    %723 = vmatpush1.msra.mxu0 0.0
    %724 = vmatprep.mubr.f32.mxu0 0.0
    %725 = vmatmul.mubr.f32.gmra.mrb[0].mxu0 %v658
    %v726 = vpop.f32.mrb[0].mxu0
    %v727 = vadd.f32 0.0, %v726
    %v728 = vpop.f32.mrb[0].mxu0
    %729 = vdwg.mxu0
    %v730 = vadd.f32 %v41, %v727
    %v731 = vld [vmem:[%s8] sm:$0x1]
    %v732 = vmul.f32 %v730, %v730
    %v733 = vsel %vm50, %v732, 0.0
    %734 = vadd.xlane.f32.xlu0 %v733
    %v735 = vpop.xlane.xlu0 %734
    %v736 = vmul.f32 %v735, %v54
    %v737 = vadd.f32 %v736, 1e-06
    %v738 = vrsqrt.pop %v737
    %v739 = vmul.f32 %v730, %v738
    %v741 = vlaneseq
    %v742 = vshrl.u32 %v741, 7
    %v743 = vsub.s32 0, %v742
    %v744 = vrot.slane %v731, %v743
    %v746 = vmul.f32 %v739, %v744
    %v747 = vld [vmem:[%s9] sm:$0xff]
    %v748 = vld [vmem:[%s9 + $0x8] sm:$0xff]
    %v749 = vld [vmem:[%s9 + $0x10] sm:$0xff]
    %v750 = vld [vmem:[%s9 + $0x18] sm:$0xff]
    %v752 = vsel %vm50, %v746, 0
    %754 = vmatprep.subr.mxu0 0.0
    %755 = vmatpush1.msra.mxu0 %v747
    %756 = vmatprep.subr.mxu0 0.0
    %757 = vmatpush1.msra.mxu0 %v748
    %758 = vmatprep.subr.mxu0 0.0
    %759 = vmatpush1.msra.mxu0 %v749
    %760 = vmatprep.subr.mxu0 0.0
    %761 = vmatpush1.msra.mxu0 %v750
    %762 = vmatprep.subr.mxu0 0.0
    %763 = vmatpush1.msra.mxu0 0.0
    %764 = vmatprep.subr.mxu0 0.0
    %765 = vmatpush1.msra.mxu0 0.0
    %766 = vmatprep.subr.mxu0 0.0
    %767 = vmatpush1.msra.mxu0 0.0
    %768 = vmatprep.subr.mxu0 0.0
    %769 = vmatpush1.msra.mxu0 0.0
    %770 = vmatprep.subr.mxu0 0.0
    %771 = vmatpush1.msra.mxu0 0.0
    %772 = vmatprep.subr.mxu0 0.0
    %773 = vmatpush1.msra.mxu0 0.0
    %774 = vmatprep.subr.mxu0 0.0
    %775 = vmatpush1.msra.mxu0 0.0
    %776 = vmatprep.subr.mxu0 0.0
    %777 = vmatpush1.msra.mxu0 0.0
    %778 = vmatprep.subr.mxu0 0.0
    %779 = vmatpush1.msra.mxu0 0.0
    %780 = vmatprep.subr.mxu0 0.0
    %781 = vmatpush1.msra.mxu0 0.0
    %782 = vmatprep.subr.mxu0 0.0
    %783 = vmatpush1.msra.mxu0 0.0
    %784 = vmatprep.subr.mxu0 0.0
    %785 = vmatpush1.msra.mxu0 0.0
    %786 = vmatprep.subr.mxu0 0.0
    %787 = vmatpush1.msra.mxu0 0.0
    %788 = vmatprep.subr.mxu0 0.0
    %789 = vmatpush1.msra.mxu0 0.0
    %790 = vmatprep.subr.mxu0 0.0
    %791 = vmatpush1.msra.mxu0 0.0
    %792 = vmatprep.subr.mxu0 0.0
    %793 = vmatpush1.msra.mxu0 0.0
    %794 = vmatprep.subr.mxu0 0.0
    %795 = vmatpush1.msra.mxu0 0.0
    %796 = vmatprep.subr.mxu0 0.0
    %797 = vmatpush1.msra.mxu0 0.0
    %798 = vmatprep.subr.mxu0 0.0
    %799 = vmatpush1.msra.mxu0 0.0
    %800 = vmatprep.subr.mxu0 0.0
    %801 = vmatpush1.msra.mxu0 0.0
    %802 = vmatprep.subr.mxu0 0.0
    %803 = vmatpush1.msra.mxu0 0.0
    %804 = vmatprep.subr.mxu0 0.0
    %805 = vmatpush1.msra.mxu0 0.0
    %806 = vmatprep.subr.mxu0 0.0
    %807 = vmatpush1.msra.mxu0 0.0
    %808 = vmatprep.subr.mxu0 0.0
    %809 = vmatpush1.msra.mxu0 0.0
    %810 = vmatprep.subr.mxu0 0.0
    %811 = vmatpush1.msra.mxu0 0.0
    %812 = vmatprep.subr.mxu0 0.0
    %813 = vmatpush1.msra.mxu0 0.0
    %814 = vmatprep.subr.mxu0 0.0
    %815 = vmatpush1.msra.mxu0 0.0
    %816 = vmatprep.subr.mxu0 0.0
    %817 = vmatpush1.msra.mxu0 0.0
    %818 = vmatprep.mubr.f32.mxu0 0.0
    %819 = vmatmul.mubr.f32.gmra.mrb[0].mxu0 %v752
    %v820 = vpop.f32.mrb[0].mxu0
    %v821 = vadd.f32 0.0, %v820
    %v822 = vpop.f32.mrb[0].mxu0
    %823 = vdwg.mxu0
    %v824 = vxor.u32 %v821, 2147483648
    %v825 = vmul.f32 %v824, 1.442695
    %v826 = vpow.pop %v825
    %v827 = vadd.f32 %v826, 1.0
    %v828 = vrcp.pop %v827
    %v829 = vmul.f32 1.0, %v828
    %v830 = vmul.f32 %v821, %v829
    %832 = vrot.lane.b32.xlu0 %v821, 64
    %v833 = vpop.permute.xlu0 %832
    %v835 = vmul.f32 %v830, %v833
    %v836 = vld [vmem:[%s10] sm:$0xff]
    %v837 = vld [vmem:[%s10 + $0x8] sm:$0xff]
    %v838 = vld [vmem:[%s10 + $0x10] sm:$0xff]
    %v839 = vld [vmem:[%s10 + $0x18] sm:$0xff]
    %v840 = vld [vmem:[%s10 + $0x20] sm:$0xff]
    %v841 = vld [vmem:[%s10 + $0x28] sm:$0xff]
    %v842 = vld [vmem:[%s10 + $0x30] sm:$0xff]
    %v843 = vld [vmem:[%s10 + $0x38] sm:$0xff]
    %vm844 = vcmask 523264
    %v846 = vsel %vm844, %v835, 0
    %848 = vmatprep.subr.mxu0 0.0
    %849 = vmatpush1.msra.mxu0 %v836
    %850 = vmatprep.subr.mxu0 0.0
    %851 = vmatpush1.msra.mxu0 %v837
    %852 = vmatprep.subr.mxu0 0.0
    %853 = vmatpush1.msra.mxu0 %v838
    %854 = vmatprep.subr.mxu0 0.0
    %855 = vmatpush1.msra.mxu0 %v839
    %856 = vmatprep.subr.mxu0 0.0
    %857 = vmatpush1.msra.mxu0 %v840
    %858 = vmatprep.subr.mxu0 0.0
    %859 = vmatpush1.msra.mxu0 %v841
    %860 = vmatprep.subr.mxu0 0.0
    %861 = vmatpush1.msra.mxu0 %v842
    %862 = vmatprep.subr.mxu0 0.0
    %863 = vmatpush1.msra.mxu0 %v843
    %864 = vmatprep.subr.mxu0 0.0
    %865 = vmatpush1.msra.mxu0 0.0
    %866 = vmatprep.subr.mxu0 0.0
    %867 = vmatpush1.msra.mxu0 0.0
    %868 = vmatprep.subr.mxu0 0.0
    %869 = vmatpush1.msra.mxu0 0.0
    %870 = vmatprep.subr.mxu0 0.0
    %871 = vmatpush1.msra.mxu0 0.0
    %872 = vmatprep.subr.mxu0 0.0
    %873 = vmatpush1.msra.mxu0 0.0
    %874 = vmatprep.subr.mxu0 0.0
    %875 = vmatpush1.msra.mxu0 0.0
    %876 = vmatprep.subr.mxu0 0.0
    %877 = vmatpush1.msra.mxu0 0.0
    %878 = vmatprep.subr.mxu0 0.0
    %879 = vmatpush1.msra.mxu0 0.0
    %880 = vmatprep.subr.mxu0 0.0
    %881 = vmatpush1.msra.mxu0 0.0
    %882 = vmatprep.subr.mxu0 0.0
    %883 = vmatpush1.msra.mxu0 0.0
    %884 = vmatprep.subr.mxu0 0.0
    %885 = vmatpush1.msra.mxu0 0.0
    %886 = vmatprep.subr.mxu0 0.0
    %887 = vmatpush1.msra.mxu0 0.0
    %888 = vmatprep.subr.mxu0 0.0
    %889 = vmatpush1.msra.mxu0 0.0
    %890 = vmatprep.subr.mxu0 0.0
    %891 = vmatpush1.msra.mxu0 0.0
    %892 = vmatprep.subr.mxu0 0.0
    %893 = vmatpush1.msra.mxu0 0.0
    %894 = vmatprep.subr.mxu0 0.0
    %895 = vmatpush1.msra.mxu0 0.0
    %896 = vmatprep.subr.mxu0 0.0
    %897 = vmatpush1.msra.mxu0 0.0
    %898 = vmatprep.subr.mxu0 0.0
    %899 = vmatpush1.msra.mxu0 0.0
    %900 = vmatprep.subr.mxu0 0.0
    %901 = vmatpush1.msra.mxu0 0.0
    %902 = vmatprep.subr.mxu0 0.0
    %903 = vmatpush1.msra.mxu0 0.0
    %904 = vmatprep.subr.mxu0 0.0
    %905 = vmatpush1.msra.mxu0 0.0
    %906 = vmatprep.subr.mxu0 0.0
    %907 = vmatpush1.msra.mxu0 0.0
    %908 = vmatprep.subr.mxu0 0.0
    %909 = vmatpush1.msra.mxu0 0.0
    %910 = vmatprep.subr.mxu0 0.0
    %911 = vmatpush1.msra.mxu0 0.0
    %912 = vmatprep.mubr.f32.mxu0 0.0
    %913 = vmatmul.mubr.f32.gmra.mrb[0].mxu0 %v846
    %v914 = vpop.f32.mrb[0].mxu0
    %v915 = vadd.f32 0.0, %v914
    %v916 = vpop.f32.mrb[0].mxu0
    %917 = vdwg.mxu0
    %v918 = vadd.f32 %v730, %v915
    %s919 = scalar_lea.vmem %s4, 1
    %v920 = vld [vmem:[%s919] sm:$0x1]
    %v921 = vmul.f32 %v918, %v918
    %v922 = vsel %vm50, %v921, 0.0
    %923 = vadd.xlane.f32.xlu0 %v922
    %v924 = vpop.xlane.xlu0 %923
    %v925 = vmul.f32 %v924, %v54
    %v926 = vadd.f32 %v925, 1e-06
    %v927 = vrsqrt.pop %v926
    %v928 = vmul.f32 %v918, %v927
    %v930 = vlaneseq
    %v931 = vshrl.u32 %v930, 7
    %v932 = vsub.s32 0, %v931
    %v933 = vrot.slane %v920, %v932
    %v935 = vmul.f32 %v928, %v933
    %s936 = scalar_lea.vmem %s5, 32
    %v937 = vld [vmem:[%s936] sm:$0xff]
    %v938 = vld [vmem:[%s936 + $0x8] sm:$0xff]
    %v939 = vld [vmem:[%s936 + $0x10] sm:$0xff]
    %v940 = vld [vmem:[%s936 + $0x18] sm:$0xff]
    %s941 = scalar_lea.vmem %s6, 1
    %v942 = vld [vmem:[%s941] sm:$0x1]
    %v944 = vlaneseq
    %v945 = vshrl.u32 %v944, 7
    %v946 = vsub.s32 0, %v945
    %v947 = vrot.slane %v942, %v946
    %v950 = vsel %vm50, %v935, 0
    %952 = vmatprep.subr.mxu0 0.0
    %953 = vmatpush1.msra.mxu0 %v937
    %954 = vmatprep.subr.mxu0 0.0
    %955 = vmatpush1.msra.mxu0 %v938
    %956 = vmatprep.subr.mxu0 0.0
    %957 = vmatpush1.msra.mxu0 %v939
    %958 = vmatprep.subr.mxu0 0.0
    %959 = vmatpush1.msra.mxu0 %v940
    %960 = vmatprep.subr.mxu0 0.0
    %961 = vmatpush1.msra.mxu0 0.0
    %962 = vmatprep.subr.mxu0 0.0
    %963 = vmatpush1.msra.mxu0 0.0
    %964 = vmatprep.subr.mxu0 0.0
    %965 = vmatpush1.msra.mxu0 0.0
    %966 = vmatprep.subr.mxu0 0.0
    %967 = vmatpush1.msra.mxu0 0.0
    %968 = vmatprep.subr.mxu0 0.0
    %969 = vmatpush1.msra.mxu0 0.0
    %970 = vmatprep.subr.mxu0 0.0
    %971 = vmatpush1.msra.mxu0 0.0
    %972 = vmatprep.subr.mxu0 0.0
    %973 = vmatpush1.msra.mxu0 0.0
    %974 = vmatprep.subr.mxu0 0.0
    %975 = vmatpush1.msra.mxu0 0.0
    %976 = vmatprep.subr.mxu0 0.0
    %977 = vmatpush1.msra.mxu0 0.0
    %978 = vmatprep.subr.mxu0 0.0
    %979 = vmatpush1.msra.mxu0 0.0
    %980 = vmatprep.subr.mxu0 0.0
    %981 = vmatpush1.msra.mxu0 0.0
    %982 = vmatprep.subr.mxu0 0.0
    %983 = vmatpush1.msra.mxu0 0.0
    %984 = vmatprep.subr.mxu0 0.0
    %985 = vmatpush1.msra.mxu0 0.0
    %986 = vmatprep.subr.mxu0 0.0
    %987 = vmatpush1.msra.mxu0 0.0
    %988 = vmatprep.subr.mxu0 0.0
    %989 = vmatpush1.msra.mxu0 0.0
    %990 = vmatprep.subr.mxu0 0.0
    %991 = vmatpush1.msra.mxu0 0.0
    %992 = vmatprep.subr.mxu0 0.0
    %993 = vmatpush1.msra.mxu0 0.0
    %994 = vmatprep.subr.mxu0 0.0
    %995 = vmatpush1.msra.mxu0 0.0
    %996 = vmatprep.subr.mxu0 0.0
    %997 = vmatpush1.msra.mxu0 0.0
    %998 = vmatprep.subr.mxu0 0.0
    %999 = vmatpush1.msra.mxu0 0.0
    %1000 = vmatprep.subr.mxu0 0.0
    %1001 = vmatpush1.msra.mxu0 0.0
    %1002 = vmatprep.subr.mxu0 0.0
    %1003 = vmatpush1.msra.mxu0 0.0
    %1004 = vmatprep.subr.mxu0 0.0
    %1005 = vmatpush1.msra.mxu0 0.0
    %1006 = vmatprep.subr.mxu0 0.0
    %1007 = vmatpush1.msra.mxu0 0.0
    %1008 = vmatprep.subr.mxu0 0.0
    %1009 = vmatpush1.msra.mxu0 0.0
    %1010 = vmatprep.subr.mxu0 0.0
    %1011 = vmatpush1.msra.mxu0 0.0
    %1012 = vmatprep.subr.mxu0 0.0
    %1013 = vmatpush1.msra.mxu0 0.0
    %1014 = vmatprep.subr.mxu0 0.0
    %1015 = vmatpush1.msra.mxu0 0.0
    %1016 = vmatprep.mubr.f32.mxu0 0.0
    %1017 = vmatmul.mubr.f32.gmra.mrb[0].mxu0 %v950
    %v1018 = vpop.f32.mrb[0].mxu0
    %v1019 = vadd.f32 %v947, %v1018
    %v1020 = vpop.f32.mrb[0].mxu0
    %1021 = vdwg.mxu0
    %1023 = vrot.lane.b32.xlu0 %v1019, 120
    %v1024 = vpop.permute.xlu0 %1023
    %1026 = vrot.lane.b32.xlu0 %v1019, 112
    %v1027 = vpop.permute.xlu0 %1026
    %1028 = vrot.lane.b32.xlu0 %v1024, 112
    %v1029 = vpop.permute.xlu0 %1028
    %v1032 = vmul.f32 %v1019, %v42
    %v1033 = vmul.f32 %v1024, %v43
    %v1034 = vmul.f32 %v1027, %v42
    %v1035 = vmul.f32 %v1029, %v43
    %1036 = vrot.lane.b32.xlu0 %v1019, 124
    %v1037 = vpop.permute.xlu0 %1036
    %1038 = vrot.lane.b32.xlu0 %v1024, 124
    %v1039 = vpop.permute.xlu0 %1038
    %1040 = vrot.lane.b32.xlu0 %v1027, 124
    %v1041 = vpop.permute.xlu0 %1040
    %1042 = vrot.lane.b32.xlu0 %v1029, 124
    %v1043 = vpop.permute.xlu0 %1042
    %1048 = vrot.lane.b32.xlu0 %v1019, 4
    %v1049 = vpop.permute.xlu0 %1048
    %1050 = vrot.lane.b32.xlu0 %v1024, 4
    %v1051 = vpop.permute.xlu0 %1050
    %1052 = vrot.lane.b32.xlu0 %v1027, 4
    %v1053 = vpop.permute.xlu0 %1052
    %1054 = vrot.lane.b32.xlu0 %v1029, 4
    %v1055 = vpop.permute.xlu0 %1054
    %v1060 = vsel %vm188, %v1037, %v1049
    %v1061 = vsel %vm188, %v1039, %v1051
    %v1062 = vsel %vm188, %v1041, %v1053
    %v1063 = vsel %vm188, %v1043, %v1055
    %v1064 = vmul.f32 %v1060, %v44
    %v1065 = vmul.f32 %v1061, %v45
    %v1066 = vmul.f32 %v1062, %v44
    %v1067 = vmul.f32 %v1063, %v45
    %v1068 = vadd.f32 %v1032, %v1064
    %v1069 = vadd.f32 %v1033, %v1065
    %v1070 = vadd.f32 %v1034, %v1066
    %v1071 = vadd.f32 %v1035, %v1067
    %v1072 = vmul.f32 %v1019, %v203
    %v1073 = vmul.f32 %v1024, %v203
    %1074 = vrot.lane.b32.xlu0 %v1019, 92
    %v1075 = vpop.permute.xlu0 %1074
    %1076 = vrot.lane.b32.xlu0 %v1024, 92
    %v1077 = vpop.permute.xlu0 %1076
    %1080 = vrot.lane.b32.xlu0 %v1019, 100
    %v1081 = vpop.permute.xlu0 %1080
    %1082 = vrot.lane.b32.xlu0 %v1024, 100
    %v1083 = vpop.permute.xlu0 %1082
    %v1086 = vsel %vm188, %v1075, %v1081
    %v1087 = vsel %vm188, %v1077, %v1083
    %v1088 = vmul.f32 %v1086, %v44
    %v1089 = vmul.f32 %v1087, %v44
    %1092 = vrot.lane.b32.xlu0 %v1088, 32
    %v1093 = vpop.permute.xlu0 %1092
    %1094 = vrot.lane.b32.xlu0 %v1089, 32
    %v1095 = vpop.permute.xlu0 %1094
    %v1098 = vadd.f32 %v1072, %v1093
    %v1099 = vadd.f32 %v1073, %v1095
    %1101 = vrot.lane.b32.xlu0 %v1098, 96
    %v1102 = vpop.permute.xlu0 %1101
    %1105 = vrot.lane.b32.xlu0 %v1099, 104
    %v1106 = vpop.permute.xlu0 %1105
    %1108 = vrot.lane.b32.xlu0 %v1019, 96
    %v1109 = vpop.permute.xlu0 %1108
    %v1111 = vsel %vm244, %v1102, %v1106
    %v1112 = vsel %vm246, %v1111, %v1109
    %s1113 = scalar_lea.vmem %s12, 8
    %1114 = vst.msk [vmem:[%s1113] sm:$0xff] %vm50, %v1112
    %v1116 = vsel %vm244, %v1068, 0
    %v1119 = vsel %vm244, %v1069, 0
    %v1121 = vsel %vm244, %v1102, 0
    %1123 = vmatprep.subr.mxu0 0.0
    %1124 = vmatpush1.xpose.msra.mxu0 %v1121
    %1125 = vmatprep.subr.mxu0 0.0
    %1126 = vmatpush1.xpose.msra.mxu0 0.0
    %1127 = vmatprep.subr.mxu0 0.0
    %1128 = vmatpush1.xpose.msra.mxu0 0.0
    %1129 = vmatprep.subr.mxu0 0.0
    %1130 = vmatpush1.xpose.msra.mxu0 0.0
    %1131 = vmatprep.subr.mxu0 0.0
    %1132 = vmatpush1.xpose.msra.mxu0 0.0
    %1133 = vmatprep.subr.mxu0 0.0
    %1134 = vmatpush1.xpose.msra.mxu0 0.0
    %1135 = vmatprep.subr.mxu0 0.0
    %1136 = vmatpush1.xpose.msra.mxu0 0.0
    %1137 = vmatprep.subr.mxu0 0.0
    %1138 = vmatpush1.xpose.msra.mxu0 0.0
    %1139 = vmatprep.subr.mxu0 0.0
    %1140 = vmatpush1.xpose.msra.mxu0 0.0
    %1141 = vmatprep.subr.mxu0 0.0
    %1142 = vmatpush1.xpose.msra.mxu0 0.0
    %1143 = vmatprep.subr.mxu0 0.0
    %1144 = vmatpush1.xpose.msra.mxu0 0.0
    %1145 = vmatprep.subr.mxu0 0.0
    %1146 = vmatpush1.xpose.msra.mxu0 0.0
    %1147 = vmatprep.subr.mxu0 0.0
    %1148 = vmatpush1.xpose.msra.mxu0 0.0
    %1149 = vmatprep.subr.mxu0 0.0
    %1150 = vmatpush1.xpose.msra.mxu0 0.0
    %1151 = vmatprep.subr.mxu0 0.0
    %1152 = vmatpush1.xpose.msra.mxu0 0.0
    %1153 = vmatprep.subr.mxu0 0.0
    %1154 = vmatpush1.xpose.msra.mxu0 0.0
    %1155 = vmatprep.subr.mxu0 0.0
    %1156 = vmatpush1.xpose.msra.mxu0 0.0
    %1157 = vmatprep.subr.mxu0 0.0
    %1158 = vmatpush1.xpose.msra.mxu0 0.0
    %1159 = vmatprep.subr.mxu0 0.0
    %1160 = vmatpush1.xpose.msra.mxu0 0.0
    %1161 = vmatprep.subr.mxu0 0.0
    %1162 = vmatpush1.xpose.msra.mxu0 0.0
    %1163 = vmatprep.subr.mxu0 0.0
    %1164 = vmatpush1.xpose.msra.mxu0 0.0
    %1165 = vmatprep.subr.mxu0 0.0
    %1166 = vmatpush1.xpose.msra.mxu0 0.0
    %1167 = vmatprep.subr.mxu0 0.0
    %1168 = vmatpush1.xpose.msra.mxu0 0.0
    %1169 = vmatprep.subr.mxu0 0.0
    %1170 = vmatpush1.xpose.msra.mxu0 0.0
    %1171 = vmatprep.subr.mxu0 0.0
    %1172 = vmatpush1.xpose.msra.mxu0 0.0
    %1173 = vmatprep.subr.mxu0 0.0
    %1174 = vmatpush1.xpose.msra.mxu0 0.0
    %1175 = vmatprep.subr.mxu0 0.0
    %1176 = vmatpush1.xpose.msra.mxu0 0.0
    %1177 = vmatprep.subr.mxu0 0.0
    %1178 = vmatpush1.xpose.msra.mxu0 0.0
    %1179 = vmatprep.subr.mxu0 0.0
    %1180 = vmatpush1.xpose.msra.mxu0 0.0
    %1181 = vmatprep.subr.mxu0 0.0
    %1182 = vmatpush1.xpose.msra.mxu0 0.0
    %1183 = vmatprep.subr.mxu0 0.0
    %1184 = vmatpush1.xpose.msra.mxu0 0.0
    %1185 = vmatprep.subr.mxu0 0.0
    %1186 = vmatpush1.xpose.msra.mxu0 0.0
    %1187 = vmatprep.mubr.f32.mxu0 0.0
    %1188 = vmatmul.mubr.f32.gmra.mrb[0].mxu0 %v1116
    %v1189 = vpop.f32.mrb[0].mxu0
    %v1190 = vadd.f32 0.0, %v1189
    %v1191 = vpop.f32.mrb[0].mxu0
    %1192 = vmatprep.mubr.f32.mxu0 0.0
    %1193 = vmatmul.mubr.f32.gmra.mrb[0].mxu0 %v1119
    %v1194 = vpop.f32.mrb[0].mxu0
    %v1195 = vadd.f32 0.0, %v1194
    %v1196 = vpop.f32.mrb[0].mxu0
    %1197 = vdwg.mxu0
    %1198 = vrot.lane.b32.xlu0 %v1099, 96
    %v1199 = vpop.permute.xlu0 %1198
    %v1201 = vsel %vm244, %v1070, 0
    %v1204 = vsel %vm244, %v1071, 0
    %v1206 = vsel %vm244, %v1199, 0
    %1208 = vmatprep.subr.mxu0 0.0
    %1209 = vmatpush1.xpose.msra.mxu0 %v1206
    %1210 = vmatprep.subr.mxu0 0.0
    %1211 = vmatpush1.xpose.msra.mxu0 0.0
    %1212 = vmatprep.subr.mxu0 0.0
    %1213 = vmatpush1.xpose.msra.mxu0 0.0
    %1214 = vmatprep.subr.mxu0 0.0
    %1215 = vmatpush1.xpose.msra.mxu0 0.0
    %1216 = vmatprep.subr.mxu0 0.0
    %1217 = vmatpush1.xpose.msra.mxu0 0.0
    %1218 = vmatprep.subr.mxu0 0.0
    %1219 = vmatpush1.xpose.msra.mxu0 0.0
    %1220 = vmatprep.subr.mxu0 0.0
    %1221 = vmatpush1.xpose.msra.mxu0 0.0
    %1222 = vmatprep.subr.mxu0 0.0
    %1223 = vmatpush1.xpose.msra.mxu0 0.0
    %1224 = vmatprep.subr.mxu0 0.0
    %1225 = vmatpush1.xpose.msra.mxu0 0.0
    %1226 = vmatprep.subr.mxu0 0.0
    %1227 = vmatpush1.xpose.msra.mxu0 0.0
    %1228 = vmatprep.subr.mxu0 0.0
    %1229 = vmatpush1.xpose.msra.mxu0 0.0
    %1230 = vmatprep.subr.mxu0 0.0
    %1231 = vmatpush1.xpose.msra.mxu0 0.0
    %1232 = vmatprep.subr.mxu0 0.0
    %1233 = vmatpush1.xpose.msra.mxu0 0.0
    %1234 = vmatprep.subr.mxu0 0.0
    %1235 = vmatpush1.xpose.msra.mxu0 0.0
    %1236 = vmatprep.subr.mxu0 0.0
    %1237 = vmatpush1.xpose.msra.mxu0 0.0
    %1238 = vmatprep.subr.mxu0 0.0
    %1239 = vmatpush1.xpose.msra.mxu0 0.0
    %1240 = vmatprep.subr.mxu0 0.0
    %1241 = vmatpush1.xpose.msra.mxu0 0.0
    %1242 = vmatprep.subr.mxu0 0.0
    %1243 = vmatpush1.xpose.msra.mxu0 0.0
    %1244 = vmatprep.subr.mxu0 0.0
    %1245 = vmatpush1.xpose.msra.mxu0 0.0
    %1246 = vmatprep.subr.mxu0 0.0
    %1247 = vmatpush1.xpose.msra.mxu0 0.0
    %1248 = vmatprep.subr.mxu0 0.0
    %1249 = vmatpush1.xpose.msra.mxu0 0.0
    %1250 = vmatprep.subr.mxu0 0.0
    %1251 = vmatpush1.xpose.msra.mxu0 0.0
    %1252 = vmatprep.subr.mxu0 0.0
    %1253 = vmatpush1.xpose.msra.mxu0 0.0
    %1254 = vmatprep.subr.mxu0 0.0
    %1255 = vmatpush1.xpose.msra.mxu0 0.0
    %1256 = vmatprep.subr.mxu0 0.0
    %1257 = vmatpush1.xpose.msra.mxu0 0.0
    %1258 = vmatprep.subr.mxu0 0.0
    %1259 = vmatpush1.xpose.msra.mxu0 0.0
    %1260 = vmatprep.subr.mxu0 0.0
    %1261 = vmatpush1.xpose.msra.mxu0 0.0
    %1262 = vmatprep.subr.mxu0 0.0
    %1263 = vmatpush1.xpose.msra.mxu0 0.0
    %1264 = vmatprep.subr.mxu0 0.0
    %1265 = vmatpush1.xpose.msra.mxu0 0.0
    %1266 = vmatprep.subr.mxu0 0.0
    %1267 = vmatpush1.xpose.msra.mxu0 0.0
    %1268 = vmatprep.subr.mxu0 0.0
    %1269 = vmatpush1.xpose.msra.mxu0 0.0
    %1270 = vmatprep.subr.mxu0 0.0
    %1271 = vmatpush1.xpose.msra.mxu0 0.0
    %1272 = vmatprep.mubr.f32.mxu0 0.0
    %1273 = vmatmul.mubr.f32.gmra.mrb[0].mxu0 %v1201
    %v1274 = vpop.f32.mrb[0].mxu0
    %v1275 = vadd.f32 0.0, %v1274
    %v1276 = vpop.f32.mrb[0].mxu0
    %1277 = vmatprep.mubr.f32.mxu0 0.0
    %1278 = vmatmul.mubr.f32.gmra.mrb[0].mxu0 %v1204
    %v1279 = vpop.f32.mrb[0].mxu0
    %v1280 = vadd.f32 0.0, %v1279
    %v1281 = vpop.f32.mrb[0].mxu0
    %1282 = vdwg.mxu0
    %v1283 = vmul.f32 %v1190, 0.35355338
    %v1284 = vmul.f32 %v1195, 0.35355338
    %v1285 = vmul.f32 %v1275, 0.35355338
    %v1286 = vmul.f32 %v1280, 0.35355338
    %v1287 = vadd.f32 %v1283, %v46
    %v1288 = vadd.f32 %v1284, %v47
    %v1289 = vadd.f32 %v1285, %v46
    %v1290 = vadd.f32 %v1286, %v47
    %v1291 = vsel %vm244, %v1287, -inf
    %1292 = vmax.xlane.f32.xlu0 %v1291
    %v1293 = vpop.xlane.xlu0 %1292
    %v1294 = vsel %vm244, %v1288, -inf
    %1295 = vmax.xlane.f32.xlu0 %v1294
    %v1296 = vpop.xlane.xlu0 %1295
    %v1297 = vsel %vm244, %v1289, -inf
    %1298 = vmax.xlane.f32.xlu0 %v1297
    %v1299 = vpop.xlane.xlu0 %1298
    %v1300 = vsel %vm244, %v1290, -inf
    %1301 = vmax.xlane.f32.xlu0 %v1300
    %v1302 = vpop.xlane.xlu0 %1301
    %v1303 = vsub.f32 %v1287, %v1293
    %v1304 = vsub.f32 %v1288, %v1296
    %v1305 = vsub.f32 %v1289, %v1299
    %v1306 = vsub.f32 %v1290, %v1302
    %v1307 = vmul.f32 %v1303, 1.442695
    %v1308 = vpow.pop %v1307
    %v1309 = vmul.f32 %v1304, 1.442695
    %v1310 = vpow.pop %v1309
    %v1311 = vmul.f32 %v1305, 1.442695
    %v1312 = vpow.pop %v1311
    %v1313 = vmul.f32 %v1306, 1.442695
    %v1314 = vpow.pop %v1313
    %v1315 = vsel %vm244, %v1308, 0.0
    %1316 = vadd.xlane.f32.xlu0 %v1315
    %v1317 = vpop.xlane.xlu0 %1316
    %v1318 = vsel %vm244, %v1310, 0.0
    %1319 = vadd.xlane.f32.xlu0 %v1318
    %v1320 = vpop.xlane.xlu0 %1319
    %v1321 = vsel %vm244, %v1312, 0.0
    %1322 = vadd.xlane.f32.xlu0 %v1321
    %v1323 = vpop.xlane.xlu0 %1322
    %v1324 = vsel %vm244, %v1314, 0.0
    %1325 = vadd.xlane.f32.xlu0 %v1324
    %v1326 = vpop.xlane.xlu0 %1325
    %v1327 = vrcp.pop %v1317
    %v1328 = vrcp.pop %v1320
    %v1329 = vrcp.pop %v1323
    %v1330 = vrcp.pop %v1326
    %v1331 = vmul.f32 %v1308, %v1327
    %v1332 = vmul.f32 %v1310, %v1328
    %v1333 = vmul.f32 %v1312, %v1329
    %v1334 = vmul.f32 %v1314, %v1330
    %1335 = vrot.lane.b32.xlu0 %v1019, 80
    %v1336 = vpop.permute.xlu0 %1335
    %v1339 = vsel %vm244, %v1331, 0
    %v1342 = vsel %vm244, %v1332, 0
    %1344 = vmatprep.subr.mxu0 0.0
    %1345 = vmatpush1.msra.mxu0 %v1336
    %1346 = vmatprep.subr.mxu0 0.0
    %1347 = vmatpush1.msra.mxu0 0.0
    %1348 = vmatprep.subr.mxu0 0.0
    %1349 = vmatpush1.msra.mxu0 0.0
    %1350 = vmatprep.subr.mxu0 0.0
    %1351 = vmatpush1.msra.mxu0 0.0
    %1352 = vmatprep.subr.mxu0 0.0
    %1353 = vmatpush1.msra.mxu0 0.0
    %1354 = vmatprep.subr.mxu0 0.0
    %1355 = vmatpush1.msra.mxu0 0.0
    %1356 = vmatprep.subr.mxu0 0.0
    %1357 = vmatpush1.msra.mxu0 0.0
    %1358 = vmatprep.subr.mxu0 0.0
    %1359 = vmatpush1.msra.mxu0 0.0
    %1360 = vmatprep.subr.mxu0 0.0
    %1361 = vmatpush1.msra.mxu0 0.0
    %1362 = vmatprep.subr.mxu0 0.0
    %1363 = vmatpush1.msra.mxu0 0.0
    %1364 = vmatprep.subr.mxu0 0.0
    %1365 = vmatpush1.msra.mxu0 0.0
    %1366 = vmatprep.subr.mxu0 0.0
    %1367 = vmatpush1.msra.mxu0 0.0
    %1368 = vmatprep.subr.mxu0 0.0
    %1369 = vmatpush1.msra.mxu0 0.0
    %1370 = vmatprep.subr.mxu0 0.0
    %1371 = vmatpush1.msra.mxu0 0.0
    %1372 = vmatprep.subr.mxu0 0.0
    %1373 = vmatpush1.msra.mxu0 0.0
    %1374 = vmatprep.subr.mxu0 0.0
    %1375 = vmatpush1.msra.mxu0 0.0
    %1376 = vmatprep.subr.mxu0 0.0
    %1377 = vmatpush1.msra.mxu0 0.0
    %1378 = vmatprep.subr.mxu0 0.0
    %1379 = vmatpush1.msra.mxu0 0.0
    %1380 = vmatprep.subr.mxu0 0.0
    %1381 = vmatpush1.msra.mxu0 0.0
    %1382 = vmatprep.subr.mxu0 0.0
    %1383 = vmatpush1.msra.mxu0 0.0
    %1384 = vmatprep.subr.mxu0 0.0
    %1385 = vmatpush1.msra.mxu0 0.0
    %1386 = vmatprep.subr.mxu0 0.0
    %1387 = vmatpush1.msra.mxu0 0.0
    %1388 = vmatprep.subr.mxu0 0.0
    %1389 = vmatpush1.msra.mxu0 0.0
    %1390 = vmatprep.subr.mxu0 0.0
    %1391 = vmatpush1.msra.mxu0 0.0
    %1392 = vmatprep.subr.mxu0 0.0
    %1393 = vmatpush1.msra.mxu0 0.0
    %1394 = vmatprep.subr.mxu0 0.0
    %1395 = vmatpush1.msra.mxu0 0.0
    %1396 = vmatprep.subr.mxu0 0.0
    %1397 = vmatpush1.msra.mxu0 0.0
    %1398 = vmatprep.subr.mxu0 0.0
    %1399 = vmatpush1.msra.mxu0 0.0
    %1400 = vmatprep.subr.mxu0 0.0
    %1401 = vmatpush1.msra.mxu0 0.0
    %1402 = vmatprep.subr.mxu0 0.0
    %1403 = vmatpush1.msra.mxu0 0.0
    %1404 = vmatprep.subr.mxu0 0.0
    %1405 = vmatpush1.msra.mxu0 0.0
    %1406 = vmatprep.subr.mxu0 0.0
    %1407 = vmatpush1.msra.mxu0 0.0
    %1408 = vmatprep.mubr.f32.mxu0 0.0
    %1409 = vmatmul.mubr.f32.gmra.mrb[0].mxu0 %v1339
    %v1410 = vpop.f32.mrb[0].mxu0
    %v1411 = vadd.f32 0.0, %v1410
    %v1412 = vpop.f32.mrb[0].mxu0
    %1413 = vmatprep.mubr.f32.mxu0 0.0
    %1414 = vmatmul.mubr.f32.gmra.mrb[0].mxu0 %v1342
    %v1415 = vpop.f32.mrb[0].mxu0
    %v1416 = vadd.f32 0.0, %v1415
    %v1417 = vpop.f32.mrb[0].mxu0
    %1418 = vdwg.mxu0
    %1419 = vrot.lane.b32.xlu0 %v1024, 80
    %v1420 = vpop.permute.xlu0 %1419
    %v1423 = vsel %vm244, %v1333, 0
    %v1426 = vsel %vm244, %v1334, 0
    %1428 = vmatprep.subr.mxu0 0.0
    %1429 = vmatpush1.msra.mxu0 %v1420
    %1430 = vmatprep.subr.mxu0 0.0
    %1431 = vmatpush1.msra.mxu0 0.0
    %1432 = vmatprep.subr.mxu0 0.0
    %1433 = vmatpush1.msra.mxu0 0.0
    %1434 = vmatprep.subr.mxu0 0.0
    %1435 = vmatpush1.msra.mxu0 0.0
    %1436 = vmatprep.subr.mxu0 0.0
    %1437 = vmatpush1.msra.mxu0 0.0
    %1438 = vmatprep.subr.mxu0 0.0
    %1439 = vmatpush1.msra.mxu0 0.0
    %1440 = vmatprep.subr.mxu0 0.0
    %1441 = vmatpush1.msra.mxu0 0.0
    %1442 = vmatprep.subr.mxu0 0.0
    %1443 = vmatpush1.msra.mxu0 0.0
    %1444 = vmatprep.subr.mxu0 0.0
    %1445 = vmatpush1.msra.mxu0 0.0
    %1446 = vmatprep.subr.mxu0 0.0
    %1447 = vmatpush1.msra.mxu0 0.0
    %1448 = vmatprep.subr.mxu0 0.0
    %1449 = vmatpush1.msra.mxu0 0.0
    %1450 = vmatprep.subr.mxu0 0.0
    %1451 = vmatpush1.msra.mxu0 0.0
    %1452 = vmatprep.subr.mxu0 0.0
    %1453 = vmatpush1.msra.mxu0 0.0
    %1454 = vmatprep.subr.mxu0 0.0
    %1455 = vmatpush1.msra.mxu0 0.0
    %1456 = vmatprep.subr.mxu0 0.0
    %1457 = vmatpush1.msra.mxu0 0.0
    %1458 = vmatprep.subr.mxu0 0.0
    %1459 = vmatpush1.msra.mxu0 0.0
    %1460 = vmatprep.subr.mxu0 0.0
    %1461 = vmatpush1.msra.mxu0 0.0
    %1462 = vmatprep.subr.mxu0 0.0
    %1463 = vmatpush1.msra.mxu0 0.0
    %1464 = vmatprep.subr.mxu0 0.0
    %1465 = vmatpush1.msra.mxu0 0.0
    %1466 = vmatprep.subr.mxu0 0.0
    %1467 = vmatpush1.msra.mxu0 0.0
    %1468 = vmatprep.subr.mxu0 0.0
    %1469 = vmatpush1.msra.mxu0 0.0
    %1470 = vmatprep.subr.mxu0 0.0
    %1471 = vmatpush1.msra.mxu0 0.0
    %1472 = vmatprep.subr.mxu0 0.0
    %1473 = vmatpush1.msra.mxu0 0.0
    %1474 = vmatprep.subr.mxu0 0.0
    %1475 = vmatpush1.msra.mxu0 0.0
    %1476 = vmatprep.subr.mxu0 0.0
    %1477 = vmatpush1.msra.mxu0 0.0
    %1478 = vmatprep.subr.mxu0 0.0
    %1479 = vmatpush1.msra.mxu0 0.0
    %1480 = vmatprep.subr.mxu0 0.0
    %1481 = vmatpush1.msra.mxu0 0.0
    %1482 = vmatprep.subr.mxu0 0.0
    %1483 = vmatpush1.msra.mxu0 0.0
    %1484 = vmatprep.subr.mxu0 0.0
    %1485 = vmatpush1.msra.mxu0 0.0
    %1486 = vmatprep.subr.mxu0 0.0
    %1487 = vmatpush1.msra.mxu0 0.0
    %1488 = vmatprep.subr.mxu0 0.0
    %1489 = vmatpush1.msra.mxu0 0.0
    %1490 = vmatprep.subr.mxu0 0.0
    %1491 = vmatpush1.msra.mxu0 0.0
    %1492 = vmatprep.mubr.f32.mxu0 0.0
    %1493 = vmatmul.mubr.f32.gmra.mrb[0].mxu0 %v1423
    %v1494 = vpop.f32.mrb[0].mxu0
    %v1495 = vadd.f32 0.0, %v1494
    %v1496 = vpop.f32.mrb[0].mxu0
    %1497 = vmatprep.mubr.f32.mxu0 0.0
    %1498 = vmatmul.mubr.f32.gmra.mrb[0].mxu0 %v1426
    %v1499 = vpop.f32.mrb[0].mxu0
    %v1500 = vadd.f32 0.0, %v1499
    %v1501 = vpop.f32.mrb[0].mxu0
    %1502 = vdwg.mxu0
    %1504 = vrot.lane.b32.xlu0 %v1416, 8
    %v1505 = vpop.permute.xlu0 %1504
    %1508 = vrot.lane.b32.xlu0 %v1495, 16
    %v1509 = vpop.permute.xlu0 %1508
    %1512 = vrot.lane.b32.xlu0 %v1500, 24
    %v1513 = vpop.permute.xlu0 %1512
    %v1515 = vsel %vm244, %v1411, %v1505
    %v1516 = vsel %vm246, %v1515, %v1509
    %v1517 = vsel %vm651, %v1516, %v1513
    %s1518 = scalar_lea.vmem %s7, 32
    %v1519 = vld [vmem:[%s1518] sm:$0xff]
    %v1520 = vld [vmem:[%s1518 + $0x8] sm:$0xff]
    %v1521 = vld [vmem:[%s1518 + $0x10] sm:$0xff]
    %v1522 = vld [vmem:[%s1518 + $0x18] sm:$0xff]
    %v1524 = vsel %vm50, %v1517, 0
    %1526 = vmatprep.subr.mxu0 0.0
    %1527 = vmatpush1.msra.mxu0 %v1519
    %1528 = vmatprep.subr.mxu0 0.0
    %1529 = vmatpush1.msra.mxu0 %v1520
    %1530 = vmatprep.subr.mxu0 0.0
    %1531 = vmatpush1.msra.mxu0 %v1521
    %1532 = vmatprep.subr.mxu0 0.0
    %1533 = vmatpush1.msra.mxu0 %v1522
    %1534 = vmatprep.subr.mxu0 0.0
    %1535 = vmatpush1.msra.mxu0 0.0
    %1536 = vmatprep.subr.mxu0 0.0
    %1537 = vmatpush1.msra.mxu0 0.0
    %1538 = vmatprep.subr.mxu0 0.0
    %1539 = vmatpush1.msra.mxu0 0.0
    %1540 = vmatprep.subr.mxu0 0.0
    %1541 = vmatpush1.msra.mxu0 0.0
    %1542 = vmatprep.subr.mxu0 0.0
    %1543 = vmatpush1.msra.mxu0 0.0
    %1544 = vmatprep.subr.mxu0 0.0
    %1545 = vmatpush1.msra.mxu0 0.0
    %1546 = vmatprep.subr.mxu0 0.0
    %1547 = vmatpush1.msra.mxu0 0.0
    %1548 = vmatprep.subr.mxu0 0.0
    %1549 = vmatpush1.msra.mxu0 0.0
    %1550 = vmatprep.subr.mxu0 0.0
    %1551 = vmatpush1.msra.mxu0 0.0
    %1552 = vmatprep.subr.mxu0 0.0
    %1553 = vmatpush1.msra.mxu0 0.0
    %1554 = vmatprep.subr.mxu0 0.0
    %1555 = vmatpush1.msra.mxu0 0.0
    %1556 = vmatprep.subr.mxu0 0.0
    %1557 = vmatpush1.msra.mxu0 0.0
    %1558 = vmatprep.subr.mxu0 0.0
    %1559 = vmatpush1.msra.mxu0 0.0
    %1560 = vmatprep.subr.mxu0 0.0
    %1561 = vmatpush1.msra.mxu0 0.0
    %1562 = vmatprep.subr.mxu0 0.0
    %1563 = vmatpush1.msra.mxu0 0.0
    %1564 = vmatprep.subr.mxu0 0.0
    %1565 = vmatpush1.msra.mxu0 0.0
    %1566 = vmatprep.subr.mxu0 0.0
    %1567 = vmatpush1.msra.mxu0 0.0
    %1568 = vmatprep.subr.mxu0 0.0
    %1569 = vmatpush1.msra.mxu0 0.0
    %1570 = vmatprep.subr.mxu0 0.0
    %1571 = vmatpush1.msra.mxu0 0.0
    %1572 = vmatprep.subr.mxu0 0.0
    %1573 = vmatpush1.msra.mxu0 0.0
    %1574 = vmatprep.subr.mxu0 0.0
    %1575 = vmatpush1.msra.mxu0 0.0
    %1576 = vmatprep.subr.mxu0 0.0
    %1577 = vmatpush1.msra.mxu0 0.0
    %1578 = vmatprep.subr.mxu0 0.0
    %1579 = vmatpush1.msra.mxu0 0.0
    %1580 = vmatprep.subr.mxu0 0.0
    %1581 = vmatpush1.msra.mxu0 0.0
    %1582 = vmatprep.subr.mxu0 0.0
    %1583 = vmatpush1.msra.mxu0 0.0
    %1584 = vmatprep.subr.mxu0 0.0
    %1585 = vmatpush1.msra.mxu0 0.0
    %1586 = vmatprep.subr.mxu0 0.0
    %1587 = vmatpush1.msra.mxu0 0.0
    %1588 = vmatprep.subr.mxu0 0.0
    %1589 = vmatpush1.msra.mxu0 0.0
    %1590 = vmatprep.mubr.f32.mxu0 0.0
    %1591 = vmatmul.mubr.f32.gmra.mrb[0].mxu0 %v1524
    %v1592 = vpop.f32.mrb[0].mxu0
    %v1593 = vadd.f32 0.0, %v1592
    %v1594 = vpop.f32.mrb[0].mxu0
    %1595 = vdwg.mxu0
    %v1596 = vadd.f32 %v918, %v1593
    %s1597 = scalar_lea.vmem %s8, 1
    %v1598 = vld [vmem:[%s1597] sm:$0x1]
    %v1599 = vmul.f32 %v1596, %v1596
    %v1600 = vsel %vm50, %v1599, 0.0
    %1601 = vadd.xlane.f32.xlu0 %v1600
    %v1602 = vpop.xlane.xlu0 %1601
    %v1603 = vmul.f32 %v1602, %v54
    %v1604 = vadd.f32 %v1603, 1e-06
    %v1605 = vrsqrt.pop %v1604
    %v1606 = vmul.f32 %v1596, %v1605
    %v1608 = vlaneseq
    %v1609 = vshrl.u32 %v1608, 7
    %v1610 = vsub.s32 0, %v1609
    %v1611 = vrot.slane %v1598, %v1610
    %v1613 = vmul.f32 %v1606, %v1611
    %s1614 = scalar_lea.vmem %s9, 32
    %v1615 = vld [vmem:[%s1614] sm:$0xff]
    %v1616 = vld [vmem:[%s1614 + $0x8] sm:$0xff]
    %v1617 = vld [vmem:[%s1614 + $0x10] sm:$0xff]
    %v1618 = vld [vmem:[%s1614 + $0x18] sm:$0xff]
    %v1620 = vsel %vm50, %v1613, 0
    %1622 = vmatprep.subr.mxu0 0.0
    %1623 = vmatpush1.msra.mxu0 %v1615
    %1624 = vmatprep.subr.mxu0 0.0
    %1625 = vmatpush1.msra.mxu0 %v1616
    %1626 = vmatprep.subr.mxu0 0.0
    %1627 = vmatpush1.msra.mxu0 %v1617
    %1628 = vmatprep.subr.mxu0 0.0
    %1629 = vmatpush1.msra.mxu0 %v1618
    %1630 = vmatprep.subr.mxu0 0.0
    %1631 = vmatpush1.msra.mxu0 0.0
    %1632 = vmatprep.subr.mxu0 0.0
    %1633 = vmatpush1.msra.mxu0 0.0
    %1634 = vmatprep.subr.mxu0 0.0
    %1635 = vmatpush1.msra.mxu0 0.0
    %1636 = vmatprep.subr.mxu0 0.0
    %1637 = vmatpush1.msra.mxu0 0.0
    %1638 = vmatprep.subr.mxu0 0.0
    %1639 = vmatpush1.msra.mxu0 0.0
    %1640 = vmatprep.subr.mxu0 0.0
    %1641 = vmatpush1.msra.mxu0 0.0
    %1642 = vmatprep.subr.mxu0 0.0
    %1643 = vmatpush1.msra.mxu0 0.0
    %1644 = vmatprep.subr.mxu0 0.0
    %1645 = vmatpush1.msra.mxu0 0.0
    %1646 = vmatprep.subr.mxu0 0.0
    %1647 = vmatpush1.msra.mxu0 0.0
    %1648 = vmatprep.subr.mxu0 0.0
    %1649 = vmatpush1.msra.mxu0 0.0
    %1650 = vmatprep.subr.mxu0 0.0
    %1651 = vmatpush1.msra.mxu0 0.0
    %1652 = vmatprep.subr.mxu0 0.0
    %1653 = vmatpush1.msra.mxu0 0.0
    %1654 = vmatprep.subr.mxu0 0.0
    %1655 = vmatpush1.msra.mxu0 0.0
    %1656 = vmatprep.subr.mxu0 0.0
    %1657 = vmatpush1.msra.mxu0 0.0
    %1658 = vmatprep.subr.mxu0 0.0
    %1659 = vmatpush1.msra.mxu0 0.0
    %1660 = vmatprep.subr.mxu0 0.0
    %1661 = vmatpush1.msra.mxu0 0.0
    %1662 = vmatprep.subr.mxu0 0.0
    %1663 = vmatpush1.msra.mxu0 0.0
    %1664 = vmatprep.subr.mxu0 0.0
    %1665 = vmatpush1.msra.mxu0 0.0
    %1666 = vmatprep.subr.mxu0 0.0
    %1667 = vmatpush1.msra.mxu0 0.0
    %1668 = vmatprep.subr.mxu0 0.0
    %1669 = vmatpush1.msra.mxu0 0.0
    %1670 = vmatprep.subr.mxu0 0.0
    %1671 = vmatpush1.msra.mxu0 0.0
    %1672 = vmatprep.subr.mxu0 0.0
    %1673 = vmatpush1.msra.mxu0 0.0
    %1674 = vmatprep.subr.mxu0 0.0
    %1675 = vmatpush1.msra.mxu0 0.0
    %1676 = vmatprep.subr.mxu0 0.0
    %1677 = vmatpush1.msra.mxu0 0.0
    %1678 = vmatprep.subr.mxu0 0.0
    %1679 = vmatpush1.msra.mxu0 0.0
    %1680 = vmatprep.subr.mxu0 0.0
    %1681 = vmatpush1.msra.mxu0 0.0
    %1682 = vmatprep.subr.mxu0 0.0
    %1683 = vmatpush1.msra.mxu0 0.0
    %1684 = vmatprep.subr.mxu0 0.0
    %1685 = vmatpush1.msra.mxu0 0.0
    %1686 = vmatprep.mubr.f32.mxu0 0.0
    %1687 = vmatmul.mubr.f32.gmra.mrb[0].mxu0 %v1620
    %v1688 = vpop.f32.mrb[0].mxu0
    %v1689 = vadd.f32 0.0, %v1688
    %v1690 = vpop.f32.mrb[0].mxu0
    %1691 = vdwg.mxu0
    %v1692 = vxor.u32 %v1689, 2147483648
    %v1693 = vmul.f32 %v1692, 1.442695
    %v1694 = vpow.pop %v1693
    %v1695 = vadd.f32 %v1694, 1.0
    %v1696 = vrcp.pop %v1695
    %v1697 = vmul.f32 1.0, %v1696
    %v1698 = vmul.f32 %v1689, %v1697
    %1700 = vrot.lane.b32.xlu0 %v1689, 64
    %v1701 = vpop.permute.xlu0 %1700
    %v1703 = vmul.f32 %v1698, %v1701
    %s1704 = scalar_lea.vmem %s10, 64
    %v1705 = vld [vmem:[%s1704] sm:$0xff]
    %v1706 = vld [vmem:[%s1704 + $0x8] sm:$0xff]
    %v1707 = vld [vmem:[%s1704 + $0x10] sm:$0xff]
    %v1708 = vld [vmem:[%s1704 + $0x18] sm:$0xff]
    %v1709 = vld [vmem:[%s1704 + $0x20] sm:$0xff]
    %v1710 = vld [vmem:[%s1704 + $0x28] sm:$0xff]
    %v1711 = vld [vmem:[%s1704 + $0x30] sm:$0xff]
    %v1712 = vld [vmem:[%s1704 + $0x38] sm:$0xff]
    %v1714 = vsel %vm844, %v1703, 0
    %1716 = vmatprep.subr.mxu0 0.0
    %1717 = vmatpush1.msra.mxu0 %v1705
    %1718 = vmatprep.subr.mxu0 0.0
    %1719 = vmatpush1.msra.mxu0 %v1706
    %1720 = vmatprep.subr.mxu0 0.0
    %1721 = vmatpush1.msra.mxu0 %v1707
    %1722 = vmatprep.subr.mxu0 0.0
    %1723 = vmatpush1.msra.mxu0 %v1708
    %1724 = vmatprep.subr.mxu0 0.0
    %1725 = vmatpush1.msra.mxu0 %v1709
    %1726 = vmatprep.subr.mxu0 0.0
    %1727 = vmatpush1.msra.mxu0 %v1710
    %1728 = vmatprep.subr.mxu0 0.0
    %1729 = vmatpush1.msra.mxu0 %v1711
    %1730 = vmatprep.subr.mxu0 0.0
    %1731 = vmatpush1.msra.mxu0 %v1712
    %1732 = vmatprep.subr.mxu0 0.0
    %1733 = vmatpush1.msra.mxu0 0.0
    %1734 = vmatprep.subr.mxu0 0.0
    %1735 = vmatpush1.msra.mxu0 0.0
    %1736 = vmatprep.subr.mxu0 0.0
    %1737 = vmatpush1.msra.mxu0 0.0
    %1738 = vmatprep.subr.mxu0 0.0
    %1739 = vmatpush1.msra.mxu0 0.0
    %1740 = vmatprep.subr.mxu0 0.0
    %1741 = vmatpush1.msra.mxu0 0.0
    %1742 = vmatprep.subr.mxu0 0.0
    %1743 = vmatpush1.msra.mxu0 0.0
    %1744 = vmatprep.subr.mxu0 0.0
    %1745 = vmatpush1.msra.mxu0 0.0
    %1746 = vmatprep.subr.mxu0 0.0
    %1747 = vmatpush1.msra.mxu0 0.0
    %1748 = vmatprep.subr.mxu0 0.0
    %1749 = vmatpush1.msra.mxu0 0.0
    %1750 = vmatprep.subr.mxu0 0.0
    %1751 = vmatpush1.msra.mxu0 0.0
    %1752 = vmatprep.subr.mxu0 0.0
    %1753 = vmatpush1.msra.mxu0 0.0
    %1754 = vmatprep.subr.mxu0 0.0
    %1755 = vmatpush1.msra.mxu0 0.0
    %1756 = vmatprep.subr.mxu0 0.0
    %1757 = vmatpush1.msra.mxu0 0.0
    %1758 = vmatprep.subr.mxu0 0.0
    %1759 = vmatpush1.msra.mxu0 0.0
    %1760 = vmatprep.subr.mxu0 0.0
    %1761 = vmatpush1.msra.mxu0 0.0
    %1762 = vmatprep.subr.mxu0 0.0
    %1763 = vmatpush1.msra.mxu0 0.0
    %1764 = vmatprep.subr.mxu0 0.0
    %1765 = vmatpush1.msra.mxu0 0.0
    %1766 = vmatprep.subr.mxu0 0.0
    %1767 = vmatpush1.msra.mxu0 0.0
    %1768 = vmatprep.subr.mxu0 0.0
    %1769 = vmatpush1.msra.mxu0 0.0
    %1770 = vmatprep.subr.mxu0 0.0
    %1771 = vmatpush1.msra.mxu0 0.0
    %1772 = vmatprep.subr.mxu0 0.0
    %1773 = vmatpush1.msra.mxu0 0.0
    %1774 = vmatprep.subr.mxu0 0.0
    %1775 = vmatpush1.msra.mxu0 0.0
    %1776 = vmatprep.subr.mxu0 0.0
    %1777 = vmatpush1.msra.mxu0 0.0
    %1778 = vmatprep.subr.mxu0 0.0
    %1779 = vmatpush1.msra.mxu0 0.0
    %1780 = vmatprep.mubr.f32.mxu0 0.0
    %1781 = vmatmul.mubr.f32.gmra.mrb[0].mxu0 %v1714
    %v1782 = vpop.f32.mrb[0].mxu0
    %v1783 = vadd.f32 0.0, %v1782
    %v1784 = vpop.f32.mrb[0].mxu0
    %1785 = vdwg.mxu0
    %v1786 = vadd.f32 %v1596, %v1783
    %1787 = vst.msk [vmem:[#allocation2] sm:$0xff] %vm50, %v1786
    // Predicated region
    $region46: #{block_forward.1} parent=1 // pred_check
      _
    $region47: #{block_forward.1} parent=1 // pred_check_branch
      %1789 = sbr.rel (0) target = $region49
    $region48: #{block_forward.1} parent=1 // pred_region
      %s1791 = ssub.s32 128, 128
      %1792 = vsyncadd [#allocation3], %s1791
      %s1794 = sshll.u32 [#allocation2], 4
      %s1795 = int_to_ptr.vmem [resolvable:$true] %s1794
      %1797 = dma.vmem_to_hbm [thread:$0]  %s1795, 128, %s11, [#allocation3]
    $region49: #{block_forward.1} parent=1 // pred_fallthru
      _
    // Predicated region
    $region50: #{block_forward.1} parent=1 // pred_check
      _
    $region51: #{block_forward.1} parent=1 // pred_check_branch
      %1799 = sbr.rel (0) target = $region53
    $region52: #{block_forward.1} parent=1 // pred_region
      _
    $region53: #{block_forward.1} parent=1 // pred_fallthru
      _
    // Predicated region
    $region54: #{block_forward.1} parent=1 // pred_check
      _
    $region55: #{block_forward.1} parent=1 // pred_check_branch
      %1801 = sbr.rel (0) target = $region57
    $region56: #{block_forward.1} parent=1 // pred_region
      %1802 = dma.done [#allocation3], 128
    $region57: #{block_forward.1} parent=1 // pred_fallthru
      _
    // Predicated region
    $region58: #{block_forward.1} parent=1 // pred_check
      _
    $region59: #{block_forward.1} parent=1 // pred_check_branch
      %1804 = sbr.rel (0) target = $region61
    $region60: #{block_forward.1} parent=1 // pred_region
      _
    $region61: #{block_forward.1} parent=1 // pred_fallthru
      _
    %1805 = vsyncpa [#allocation3], 1

</llo_original>
